<compile_context>
chip_gen: v7x
topology: tpu7x:2x2x1
jax: 0.10.0
libtpu: 0.0.40
codegen_flags: <defaults>
</compile_context>

<pallas_src>
import jax
import jax.numpy as jnp
import numpy as np
from jax import lax
from jax.experimental import pallas as pl
from jax.experimental.pallas import tpu as pltpu


def _make_kernel(NC, NE, H, W):
    HW = H * W

    def kernel(x_ref, wa_ref, wb_ref, o_ref):
        x = x_ref[...]                                  # (NC, HW) lane-dense
        wa = wa_ref[...]                                # (NE, NC+11) = [w1|b1|wd|b2]
        wb = wb_ref[...]                                # (NC, NE+1)  = [w3|b3]

        w1 = wa[:, 0:NC]                                # (NE, NC) block-diag, BN-folded
        b1 = wa[:, NC:NC + 1]                           # (NE, 1)
        wd = wa[:, NC + 1:NC + 10]                      # (NE, 9)  depthwise taps, BN-folded
        b2 = wa[:, NC + 10:NC + 11]                     # (NE, 1)
        w3 = wb[:, 0:NE]                                # (NC, NE) block-diag, BN-folded
        b3 = wb[:, NE:NE + 1]                           # (NC, 1)

        # ---- 1x1 expand conv on the MXU + relu6 --------------------------
        h = jnp.dot(w1, x, preferred_element_type=jnp.float32,
                    precision=lax.Precision.HIGHEST)    # (NE, HW)
        h = jnp.clip(h + b1, 0.0, 6.0)

        # ---- 3x3 depthwise conv, pad=1, stride=1 (roll + boundary mask) --
        # Batch lives on sublanes, so the lane axis is purely spatial (HW).
        pos = lax.broadcasted_iota(jnp.int32, (1, HW), 1)
        if (W & (W - 1)) == 0:                          # W power of two
            wcol = jnp.bitwise_and(pos, W - 1)
        else:                                           # fallback (not hit here)
            wcol = lax.rem(pos, W)
        row_ok = {-1: pos >= W, 0: None, 1: pos < (H - 1) * W}
        col_ok = {-1: wcol >= 1, 0: None, 1: wcol <= W - 2}
        masks = {}                                      # hoisted out of tap loop
        for dy in (-1, 0, 1):
            for dx in (-1, 0, 1):
                rm, cm = row_ok[dy], col_ok[dx]
                if rm is None:
                    masks[(dy, dx)] = cm
                elif cm is None:
                    masks[(dy, dx)] = rm
                else:
                    masks[(dy, dx)] = jnp.logical_and(rm, cm)

        taps = []
        for k in range(9):                              # k = (dy+1)*3 + (dx+1)
            dy, dx = k // 3 - 1, k % 3 - 1
            d = dy * W + dx
            t = h if d == 0 else pltpu.roll(h, shift=(-d) % HW, axis=1)
            m = masks[(dy, dx)]
            if m is not None:
                t = jnp.where(m, t, 0.0)
            taps.append(t * wd[:, k:k + 1])
        # Tree accumulation -> short dependency chain instead of 9-deep serial.
        acc = (((taps[0] + taps[1]) + (taps[2] + taps[3]))
               + ((taps[4] + taps[5]) + (taps[6] + taps[7]))
               + taps[8])
        acc = jnp.clip(acc + b2, 0.0, 6.0)              # (NE, HW)

        # ---- 1x1 project conv on the MXU, no activation ------------------
        y = jnp.dot(w3, acc, preferred_element_type=jnp.float32,
                    precision=lax.Precision.HIGHEST)    # (NC, HW)

        # ---- bias + residual shortcut, full-tile lane-dense store --------
        o_ref[...] = y + b3 + x

    return kernel


def inverted_residual(x_nchw, w1, wd, w3, s1, t1, s2, t2, s3, t3):
    """x_nchw: (N, C, H, W) f32 (PyTorch layout).
    w1: (E, C) expand weights, wd: (E, 3, 3) depthwise, w3: (C, E) project.
    (s*, t*): folded BatchNorm scale / shift per channel (eval semantics)."""
    N, C, H, W = x_nchw.shape
    E = w1.shape[0]
    HW = H * W
    NC, NE = N * C, N * E

    # Batch stacked onto sublanes: free reshape of contiguous NCHW.
    x2d = x_nchw.reshape(NC, HW).astype(jnp.float32)

    # Fold BN scales into conv weights; build block-diagonal (batch-stacked)
    # weights and pack everything into two slabs (3 input DMAs total).
    eye = jnp.eye(N, dtype=jnp.float32)
    w1f = (w1 * s1[:, None]).astype(jnp.float32)                  # (E, C)
    wdf = (wd.reshape(E, 9) * s2[:, None]).astype(jnp.float32)    # (E, 9)
    w3f = (w3 * s3[:, None]).astype(jnp.float32)                  # (C, E)

    w1_blk = jnp.kron(eye, w1f)                                   # (NE, NC)
    w3_blk = jnp.kron(eye, w3f)                                   # (NC, NE)
    b1 = jnp.tile(t1.astype(jnp.float32), N)[:, None]             # (NE, 1)
    b2 = jnp.tile(t2.astype(jnp.float32), N)[:, None]             # (NE, 1)
    b3 = jnp.tile(t3.astype(jnp.float32), N)[:, None]             # (NC, 1)
    wd_blk = jnp.tile(wdf, (N, 1))                                # (NE, 9)

    slab_a = jnp.concatenate([w1_blk, b1, wd_blk, b2], axis=1)    # (NE, NC+11)
    slab_b = jnp.concatenate([w3_blk, b3], axis=1)                # (NC, NE+1)

    kernel = _make_kernel(NC, NE, H, W)

    # Single kernel invocation (no grid): whole-array blocks live in VMEM,
    # footprint is tiny, so no tiling / pipelining knobs are needed.
    out = pl.pallas_call(
        kernel,
        out_shape=jax.ShapeDtypeStruct((NC, HW), jnp.float32),
    )(x2d, slab_a, slab_b)
    return out.reshape(N, C, H, W)


def fold_bn(gamma, beta, mean, var, eps=1e-5):
    scale = gamma / jnp.sqrt(var + eps)
    shift = beta - mean * scale
    return scale, shift


def reference(x, w1, wd, w3, s1, t1, s2, t2, s3, t3):
    """Pure-JAX reference on NCHW with unfolded weights (eval-mode BN)."""
    E = w1.shape[0]
    hp = lax.Precision.HIGHEST
    h = jnp.einsum('nchw,ec->nehw', x, w1, precision=hp)
    h = jnp.clip(h * s1[None, :, None, None] + t1[None, :, None, None], 0.0, 6.0)
    f = wd[:, None, :, :]                              # (E, 1, 3, 3) OIHW
    hd = lax.conv_general_dilated(
        h, f, window_strides=(1, 1), padding=((1, 1), (1, 1)),
        dimension_numbers=('NCHW', 'OIHW', 'NCHW'),
        feature_group_count=E, precision=hp)
    hd = jnp.clip(hd * s2[None, :, None, None] + t2[None, :, None, None], 0.0, 6.0)
    y = jnp.einsum('nehw,ce->nchw', hd, w3, precision=hp)
    y = y * s3[None, :, None, None] + t3[None, :, None, None]
    return y + x


if __name__ == "__main__":
    N, C, H, W = 2, 4, 16, 16
    expand_ratio = 6.0
    E = int(float(C) * expand_ratio)                   # 24

    key = jax.random.PRNGKey(0)
    ks = jax.random.split(key, 16)

    # Input in native PyTorch NCHW layout.
    x = jax.random.normal(ks[0], (N, C, H, W), jnp.float32)

    # Conv weights (bias=False in the module).
    w1 = jax.random.normal(ks[1], (E, C), jnp.float32) * 0.2     # torch (E,C,1,1)
    wd = jax.random.normal(ks[2], (E, 3, 3), jnp.float32) * 0.2  # torch (E,1,3,3)
    w3 = jax.random.normal(ks[3], (C, E), jnp.float32) * 0.2     # torch (C,E,1,1)

    # BatchNorm params (deterministic, non-trivial), eval semantics.
    def bn_params(kg, kb, km, kv, ch):
        gamma = 1.0 + 0.1 * jax.random.normal(kg, (ch,), jnp.float32)
        beta = 0.1 * jax.random.normal(kb, (ch,), jnp.float32)
        mean = 0.1 * jax.random.normal(km, (ch,), jnp.float32)
        var = 0.5 + jnp.abs(jax.random.normal(kv, (ch,), jnp.float32))
        return gamma, beta, mean, var

    s1, t1 = fold_bn(*bn_params(ks[4], ks[5], ks[6], ks[7], E))
    s2, t2 = fold_bn(*bn_params(ks[8], ks[9], ks[10], ks[11], E))
    s3, t3 = fold_bn(*bn_params(ks[12], ks[13], ks[14], ks[15], C))

    out = inverted_residual(x, w1, wd, w3, s1, t1, s2, t2, s3, t3)
    out = jax.block_until_ready(out)

    ref = reference(x, w1, wd, w3, s1, t1, s2, t2, s3, t3)
    np.testing.assert_allclose(np.asarray(out), np.asarray(ref),
                               rtol=1e-4, atol=1e-4)
    print("KERNEL_OK")
</pallas_src>

<mosaic_0001>
module attributes {stable_mosaic.version = 11 : i64} {
  func.func @kernel(%arg0: memref<8x256xf32, #tpu.memory_space<vmem>>, %arg1: memref<48x19xf32, #tpu.memory_space<vmem>>, %arg2: memref<8x49xf32, #tpu.memory_space<vmem>>, %arg3: memref<8x256xf32, #tpu.memory_space<vmem>>) attributes {dimension_semantics = [], scalar_prefetch = 0 : i64, scratch_operands = 0 : i64, tpu.core_type = #tpu.core_type<tc>} {
    %c0 = arith.constant 0 : index
    %c0_0 = arith.constant 0 : index
    %0 = vector.load %arg0[%c0, %c0_0] : memref<8x256xf32, #tpu.memory_space<vmem>>, vector<8x256xf32>
    %c0_1 = arith.constant 0 : index
    %c0_2 = arith.constant 0 : index
    %1 = vector.load %arg1[%c0_1, %c0_2] : memref<48x19xf32, #tpu.memory_space<vmem>>, vector<48x19xf32>
    %c0_3 = arith.constant 0 : index
    %c0_4 = arith.constant 0 : index
    %2 = vector.load %arg2[%c0_3, %c0_4] : memref<8x49xf32, #tpu.memory_space<vmem>>, vector<8x49xf32>
    %3 = vector.extract_strided_slice %1 {offsets = [0, 0], sizes = [48, 8], strides = [1, 1]} : vector<48x19xf32> to vector<48x8xf32>
    %4 = vector.extract_strided_slice %1 {offsets = [0, 8], sizes = [48, 1], strides = [1, 1]} : vector<48x19xf32> to vector<48x1xf32>
    %5 = vector.extract_strided_slice %1 {offsets = [0, 9], sizes = [48, 9], strides = [1, 1]} : vector<48x19xf32> to vector<48x9xf32>
    %6 = vector.extract_strided_slice %1 {offsets = [0, 18], sizes = [48, 1], strides = [1, 1]} : vector<48x19xf32> to vector<48x1xf32>
    %7 = vector.extract_strided_slice %2 {offsets = [0, 0], sizes = [8, 48], strides = [1, 1]} : vector<8x49xf32> to vector<8x48xf32>
    %8 = vector.extract_strided_slice %2 {offsets = [0, 48], sizes = [8, 1], strides = [1, 1]} : vector<8x49xf32> to vector<8x1xf32>
    %cst = arith.constant dense<0.000000e+00> : vector<48x256xf32>
    %9 = tpu.matmul %3, %0, %cst {dimension_numbers = #tpu.dot_dimension_numbers<[1], [0], [0], [1], [0, 0, 1, 1], [], []>, precision = #tpu.contract_precision<fp32>} : vector<48x8xf32>, vector<8x256xf32>, vector<48x256xf32> -> vector<48x256xf32>
    %10 = vector.broadcast %4 : vector<48x1xf32> to vector<48x256xf32>
    %11 = arith.addf %9, %10 : vector<48x256xf32>
    %cst_5 = arith.constant 0.000000e+00 : f32
    %cst_6 = arith.constant 6.000000e+00 : f32
    %12 = vector.broadcast %cst_5 : f32 to vector<48x256xf32>
    %13 = arith.maximumf %12, %11 : vector<48x256xf32>
    %14 = vector.broadcast %cst_6 : f32 to vector<48x256xf32>
    %15 = arith.minimumf %14, %13 : vector<48x256xf32>
    %16 = tpu.iota {dimensions = array<i32: 1>} : vector<1x256xi32>
    %c15_i32 = arith.constant 15 : i32
    %17 = vector.broadcast %c15_i32 : i32 to vector<1x256xi32>
    %18 = arith.andi %16, %17 : vector<1x256xi32>
    %c16_i32 = arith.constant 16 : i32
    %19 = vector.broadcast %c16_i32 : i32 to vector<1x256xi32>
    %20 = arith.cmpi sge, %16, %19 : vector<1x256xi32>
    %c240_i32 = arith.constant 240 : i32
    %21 = vector.broadcast %c240_i32 : i32 to vector<1x256xi32>
    %22 = arith.cmpi slt, %16, %21 : vector<1x256xi32>
    %c1_i32 = arith.constant 1 : i32
    %23 = vector.broadcast %c1_i32 : i32 to vector<1x256xi32>
    %24 = arith.cmpi sge, %18, %23 : vector<1x256xi32>
    %c14_i32 = arith.constant 14 : i32
    %25 = vector.broadcast %c14_i32 : i32 to vector<1x256xi32>
    %26 = arith.cmpi sle, %18, %25 : vector<1x256xi32>
    %27 = arith.andi %20, %24 : vector<1x256xi1>
    %28 = arith.andi %20, %26 : vector<1x256xi1>
    %29 = arith.andi %22, %24 : vector<1x256xi1>
    %30 = arith.andi %22, %26 : vector<1x256xi1>
    %c17_i32 = arith.constant 17 : i32
    %31 = tpu.dynamic_rotate %15 by %c17_i32 dim 1 : vector<48x256xf32>, i32 -> vector<48x256xf32>
    %cst_7 = arith.constant 0.000000e+00 : f32
    %32 = vector.shape_cast %27 : vector<1x256xi1> to vector<1x256xi1>
    %33 = vector.broadcast %32 : vector<1x256xi1> to vector<48x256xi1>
    %34 = vector.broadcast %cst_7 : f32 to vector<48x256xf32>
    %35 = arith.select %33, %31, %34 : vector<48x256xi1>, vector<48x256xf32>
    %36 = vector.extract_strided_slice %5 {offsets = [0, 0], sizes = [48, 1], strides = [1, 1]} : vector<48x9xf32> to vector<48x1xf32>
    %37 = vector.broadcast %36 : vector<48x1xf32> to vector<48x256xf32>
    %38 = arith.mulf %35, %37 : vector<48x256xf32>
    %c16_i32_8 = arith.constant 16 : i32
    %39 = tpu.dynamic_rotate %15 by %c16_i32_8 dim 1 : vector<48x256xf32>, i32 -> vector<48x256xf32>
    %cst_9 = arith.constant 0.000000e+00 : f32
    %40 = vector.shape_cast %20 : vector<1x256xi1> to vector<1x256xi1>
    %41 = vector.broadcast %40 : vector<1x256xi1> to vector<48x256xi1>
    %42 = vector.broadcast %cst_9 : f32 to vector<48x256xf32>
    %43 = arith.select %41, %39, %42 : vector<48x256xi1>, vector<48x256xf32>
    %44 = vector.extract_strided_slice %5 {offsets = [0, 1], sizes = [48, 1], strides = [1, 1]} : vector<48x9xf32> to vector<48x1xf32>
    %45 = vector.broadcast %44 : vector<48x1xf32> to vector<48x256xf32>
    %46 = arith.mulf %43, %45 : vector<48x256xf32>
    %c15_i32_10 = arith.constant 15 : i32
    %47 = tpu.dynamic_rotate %15 by %c15_i32_10 dim 1 : vector<48x256xf32>, i32 -> vector<48x256xf32>
    %cst_11 = arith.constant 0.000000e+00 : f32
    %48 = vector.shape_cast %28 : vector<1x256xi1> to vector<1x256xi1>
    %49 = vector.broadcast %48 : vector<1x256xi1> to vector<48x256xi1>
    %50 = vector.broadcast %cst_11 : f32 to vector<48x256xf32>
    %51 = arith.select %49, %47, %50 : vector<48x256xi1>, vector<48x256xf32>
    %52 = vector.extract_strided_slice %5 {offsets = [0, 2], sizes = [48, 1], strides = [1, 1]} : vector<48x9xf32> to vector<48x1xf32>
    %53 = vector.broadcast %52 : vector<48x1xf32> to vector<48x256xf32>
    %54 = arith.mulf %51, %53 : vector<48x256xf32>
    %c1_i32_12 = arith.constant 1 : i32
    %55 = tpu.dynamic_rotate %15 by %c1_i32_12 dim 1 : vector<48x256xf32>, i32 -> vector<48x256xf32>
    %cst_13 = arith.constant 0.000000e+00 : f32
    %56 = vector.shape_cast %24 : vector<1x256xi1> to vector<1x256xi1>
    %57 = vector.broadcast %56 : vector<1x256xi1> to vector<48x256xi1>
    %58 = vector.broadcast %cst_13 : f32 to vector<48x256xf32>
    %59 = arith.select %57, %55, %58 : vector<48x256xi1>, vector<48x256xf32>
    %60 = vector.extract_strided_slice %5 {offsets = [0, 3], sizes = [48, 1], strides = [1, 1]} : vector<48x9xf32> to vector<48x1xf32>
    %61 = vector.broadcast %60 : vector<48x1xf32> to vector<48x256xf32>
    %62 = arith.mulf %59, %61 : vector<48x256xf32>
    %63 = vector.extract_strided_slice %5 {offsets = [0, 4], sizes = [48, 1], strides = [1, 1]} : vector<48x9xf32> to vector<48x1xf32>
    %64 = vector.broadcast %63 : vector<48x1xf32> to vector<48x256xf32>
    %65 = arith.mulf %15, %64 : vector<48x256xf32>
    %c255_i32 = arith.constant 255 : i32
    %66 = tpu.dynamic_rotate %15 by %c255_i32 dim 1 : vector<48x256xf32>, i32 -> vector<48x256xf32>
    %cst_14 = arith.constant 0.000000e+00 : f32
    %67 = vector.shape_cast %26 : vector<1x256xi1> to vector<1x256xi1>
    %68 = vector.broadcast %67 : vector<1x256xi1> to vector<48x256xi1>
    %69 = vector.broadcast %cst_14 : f32 to vector<48x256xf32>
    %70 = arith.select %68, %66, %69 : vector<48x256xi1>, vector<48x256xf32>
    %71 = vector.extract_strided_slice %5 {offsets = [0, 5], sizes = [48, 1], strides = [1, 1]} : vector<48x9xf32> to vector<48x1xf32>
    %72 = vector.broadcast %71 : vector<48x1xf32> to vector<48x256xf32>
    %73 = arith.mulf %70, %72 : vector<48x256xf32>
    %c241_i32 = arith.constant 241 : i32
    %74 = tpu.dynamic_rotate %15 by %c241_i32 dim 1 : vector<48x256xf32>, i32 -> vector<48x256xf32>
    %cst_15 = arith.constant 0.000000e+00 : f32
    %75 = vector.shape_cast %29 : vector<1x256xi1> to vector<1x256xi1>
    %76 = vector.broadcast %75 : vector<1x256xi1> to vector<48x256xi1>
    %77 = vector.broadcast %cst_15 : f32 to vector<48x256xf32>
    %78 = arith.select %76, %74, %77 : vector<48x256xi1>, vector<48x256xf32>
    %79 = vector.extract_strided_slice %5 {offsets = [0, 6], sizes = [48, 1], strides = [1, 1]} : vector<48x9xf32> to vector<48x1xf32>
    %80 = vector.broadcast %79 : vector<48x1xf32> to vector<48x256xf32>
    %81 = arith.mulf %78, %80 : vector<48x256xf32>
    %c240_i32_16 = arith.constant 240 : i32
    %82 = tpu.dynamic_rotate %15 by %c240_i32_16 dim 1 : vector<48x256xf32>, i32 -> vector<48x256xf32>
    %cst_17 = arith.constant 0.000000e+00 : f32
    %83 = vector.shape_cast %22 : vector<1x256xi1> to vector<1x256xi1>
    %84 = vector.broadcast %83 : vector<1x256xi1> to vector<48x256xi1>
    %85 = vector.broadcast %cst_17 : f32 to vector<48x256xf32>
    %86 = arith.select %84, %82, %85 : vector<48x256xi1>, vector<48x256xf32>
    %87 = vector.extract_strided_slice %5 {offsets = [0, 7], sizes = [48, 1], strides = [1, 1]} : vector<48x9xf32> to vector<48x1xf32>
    %88 = vector.broadcast %87 : vector<48x1xf32> to vector<48x256xf32>
    %89 = arith.mulf %86, %88 : vector<48x256xf32>
    %c239_i32 = arith.constant 239 : i32
    %90 = tpu.dynamic_rotate %15 by %c239_i32 dim 1 : vector<48x256xf32>, i32 -> vector<48x256xf32>
    %cst_18 = arith.constant 0.000000e+00 : f32
    %91 = vector.shape_cast %30 : vector<1x256xi1> to vector<1x256xi1>
    %92 = vector.broadcast %91 : vector<1x256xi1> to vector<48x256xi1>
    %93 = vector.broadcast %cst_18 : f32 to vector<48x256xf32>
    %94 = arith.select %92, %90, %93 : vector<48x256xi1>, vector<48x256xf32>
    %95 = vector.extract_strided_slice %5 {offsets = [0, 8], sizes = [48, 1], strides = [1, 1]} : vector<48x9xf32> to vector<48x1xf32>
    %96 = vector.broadcast %95 : vector<48x1xf32> to vector<48x256xf32>
    %97 = arith.mulf %94, %96 : vector<48x256xf32>
    %98 = arith.addf %38, %46 : vector<48x256xf32>
    %99 = arith.addf %54, %62 : vector<48x256xf32>
    %100 = arith.addf %98, %99 : vector<48x256xf32>
    %101 = arith.addf %65, %73 : vector<48x256xf32>
    %102 = arith.addf %81, %89 : vector<48x256xf32>
    %103 = arith.addf %101, %102 : vector<48x256xf32>
    %104 = arith.addf %100, %103 : vector<48x256xf32>
    %105 = arith.addf %104, %97 : vector<48x256xf32>
    %106 = vector.broadcast %6 : vector<48x1xf32> to vector<48x256xf32>
    %107 = arith.addf %105, %106 : vector<48x256xf32>
    %cst_19 = arith.constant 0.000000e+00 : f32
    %cst_20 = arith.constant 6.000000e+00 : f32
    %108 = vector.broadcast %cst_19 : f32 to vector<48x256xf32>
    %109 = arith.maximumf %108, %107 : vector<48x256xf32>
    %110 = vector.broadcast %cst_20 : f32 to vector<48x256xf32>
    %111 = arith.minimumf %110, %109 : vector<48x256xf32>
    %cst_21 = arith.constant dense<0.000000e+00> : vector<8x256xf32>
    %112 = tpu.matmul %7, %111, %cst_21 {dimension_numbers = #tpu.dot_dimension_numbers<[1], [0], [0], [1], [0, 0, 1, 1], [], []>, precision = #tpu.contract_precision<fp32>} : vector<8x48xf32>, vector<48x256xf32>, vector<8x256xf32> -> vector<8x256xf32>
    %113 = vector.broadcast %8 : vector<8x1xf32> to vector<8x256xf32>
    %114 = arith.addf %112, %113 : vector<8x256xf32>
    %115 = arith.addf %114, %0 : vector<8x256xf32>
    %c0_22 = arith.constant 0 : index
    %c0_23 = arith.constant 0 : index
    %116 = vector.load %arg3[%c0_22, %c0_23] : memref<8x256xf32, #tpu.memory_space<vmem>>, vector<8x256xf32>
    tpu.vector_store %arg3[%c0_22, %c0_23], %115 {strides = array<i32>} : memref<8x256xf32, #tpu.memory_space<vmem>>, vector<8x256xf32>,
    return
  }
}

</mosaic_0001>

<llo_original>
// kernel: tpu_custom_call.1
$region0: #{tpu_custom_call.1}
  #allocation0 [shape = 'u32[]', space=smem, size = 0x4, offset = 0x4, fixed_abs, tag = 'smem constant byte address 0x4 - core index']
  #allocation1 [shape = 'u32[144,128]{1,0:T(1,128)}', space=vmem, size = 0x12000, scoped, tag = 'internal scratch']
  %s0 = inlined_call_operand.vmem [shape: f32[8,256], index: 0, kind: input, shape index: {}]
  %s1 = inlined_call_operand.vmem [shape: f32[48,19], index: 1, kind: input, shape index: {}]
  %s2 = inlined_call_operand.vmem [shape: f32[8,49], index: 2, kind: input, shape index: {}]
  %s3 = inlined_call_operand.hbm [shape: f32[8,256], index: 3, kind: output, shape index: {}]
  %s4 = sld [smem:[#allocation0]]
  $region22: #{tpu_custom_call.1} parent=0
    _
  %s6 = ssub.s32 1, %s4
  %s7 = scalar_select 0, %s6, %s4
  $region1: #{tpu_custom_call.1} parent=0
    #allocation2 [shape = 'u8[8192]{0}', space=vmem, size = 0x2000, scoped, tag = 'output window, operand 0, single buffered']
    #allocation3 [shape = 's32[1]{0}', space=sflag, size = 0x4, scoped, tag = 'scoped memory for tpu_custom_call.1']
    %8 = vsyncpa [#allocation3], 0
    // Predicated region
    $region2: #{tpu_custom_call.1} parent=1 // pred_check
      _
    $region3: #{tpu_custom_call.1} parent=1 // pred_check_branch
      %10 = sbr.rel (0) target = $region5
    $region4: #{tpu_custom_call.1} parent=1 // pred_region
      _
    $region5: #{tpu_custom_call.1} parent=1 // pred_fallthru
      _
    // Predicated region
    $region6: #{tpu_custom_call.1} parent=1 // pred_check
      _
    $region7: #{tpu_custom_call.1} parent=1 // pred_check_branch
      %12 = sbr.rel (0) target = $region9
    $region8: #{tpu_custom_call.1} parent=1 // pred_region
      _
    $region9: #{tpu_custom_call.1} parent=1 // pred_fallthru
      _
    // Predicated region
    $region10: #{tpu_custom_call.1} parent=1 // pred_check
      _
    $region11: #{tpu_custom_call.1} parent=1 // pred_check_branch
      %14 = sbr.rel (0) target = $region13
    $region12: #{tpu_custom_call.1} parent=1 // pred_region
      _
    $region13: #{tpu_custom_call.1} parent=1 // pred_fallthru
      _
    %v15 = vld [vmem:[%s0] sm:$0xff]
    %v16 = vld [vmem:[%s0 + $0x8] sm:$0xff]
    %v17 = vld [vmem:[%s1] sm:$0xff]
    %v18 = vld [vmem:[%s1 + $0x8] sm:$0xff]
    %v19 = vld [vmem:[%s1 + $0x10] sm:$0xff]
    %v20 = vld [vmem:[%s1 + $0x18] sm:$0xff]
    %v21 = vld [vmem:[%s1 + $0x20] sm:$0xff]
    %v22 = vld [vmem:[%s1 + $0x28] sm:$0xff]
    %v23 = vld [vmem:[%s2] sm:$0xff]
    %25 = vset.pattern.permute.xlu0 8
    %26 = vperm.xlu0 %25, %v17
    %v27 = vpop.permute.xlu0 %26
    %30 = vset.pattern.permute.xlu0 8
    %31 = vperm.xlu0 %30, %v18
    %v32 = vpop.permute.xlu0 %31
    %35 = vset.pattern.permute.xlu0 8
    %36 = vperm.xlu0 %35, %v19
    %v37 = vpop.permute.xlu0 %36
    %40 = vset.pattern.permute.xlu0 8
    %41 = vperm.xlu0 %40, %v20
    %v42 = vpop.permute.xlu0 %41
    %45 = vset.pattern.permute.xlu0 8
    %46 = vperm.xlu0 %45, %v21
    %v47 = vpop.permute.xlu0 %46
    %50 = vset.pattern.permute.xlu0 8
    %51 = vperm.xlu0 %50, %v22
    %v52 = vpop.permute.xlu0 %51
    %vm54 = vcmask 64512
    %v55 = vsel %vm54, %v17, 0
    %v57 = vsel %vm54, %v18, 0
    %v59 = vsel %vm54, %v19, 0
    %v61 = vsel %vm54, %v20, 0
    %v63 = vsel %vm54, %v21, 0
    %v65 = vsel %vm54, %v22, 0
    %v67 = vand.u32 %v16, 4294901760
    %68 = vmatprep.subr.mxu0 %v67
    %v69 = vand.u32 %v15, 4294901760
    %70 = vmatpush1.msra.mxu0 %v69
    %71 = vmatprep.subr.mxu0 0.0
    %72 = vmatpush1.msra.mxu0 0.0
    %73 = vmatprep.subr.mxu0 0.0
    %74 = vmatpush1.msra.mxu0 0.0
    %75 = vmatprep.subr.mxu0 0.0
    %76 = vmatpush1.msra.mxu0 0.0
    %77 = vmatprep.subr.mxu0 0.0
    %78 = vmatpush1.msra.mxu0 0.0
    %79 = vmatprep.subr.mxu0 0.0
    %80 = vmatpush1.msra.mxu0 0.0
    %81 = vmatprep.subr.mxu0 0.0
    %82 = vmatpush1.msra.mxu0 0.0
    %83 = vmatprep.subr.mxu0 0.0
    %84 = vmatpush1.msra.mxu0 0.0
    %85 = vmatprep.subr.mxu0 0.0
    %86 = vmatpush1.msra.mxu0 0.0
    %87 = vmatprep.subr.mxu0 0.0
    %88 = vmatpush1.msra.mxu0 0.0
    %89 = vmatprep.subr.mxu0 0.0
    %90 = vmatpush1.msra.mxu0 0.0
    %91 = vmatprep.subr.mxu0 0.0
    %92 = vmatpush1.msra.mxu0 0.0
    %93 = vmatprep.subr.mxu0 0.0
    %94 = vmatpush1.msra.mxu0 0.0
    %95 = vmatprep.subr.mxu0 0.0
    %96 = vmatpush1.msra.mxu0 0.0
    %97 = vmatprep.subr.mxu0 0.0
    %98 = vmatpush1.msra.mxu0 0.0
    %99 = vmatprep.subr.mxu0 0.0
    %100 = vmatpush1.msra.mxu0 0.0
    %101 = vmatprep.subr.mxu0 0.0
    %102 = vmatpush1.msra.mxu0 0.0
    %103 = vmatprep.subr.mxu0 0.0
    %104 = vmatpush1.msra.mxu0 0.0
    %105 = vmatprep.subr.mxu0 0.0
    %106 = vmatpush1.msra.mxu0 0.0
    %107 = vmatprep.subr.mxu0 0.0
    %108 = vmatpush1.msra.mxu0 0.0
    %109 = vmatprep.subr.mxu0 0.0
    %110 = vmatpush1.msra.mxu0 0.0
    %111 = vmatprep.subr.mxu0 0.0
    %112 = vmatpush1.msra.mxu0 0.0
    %113 = vmatprep.subr.mxu0 0.0
    %114 = vmatpush1.msra.mxu0 0.0
    %115 = vmatprep.subr.mxu0 0.0
    %116 = vmatpush1.msra.mxu0 0.0
    %117 = vmatprep.subr.mxu0 0.0
    %118 = vmatpush1.msra.mxu0 0.0
    %119 = vmatprep.subr.mxu0 0.0
    %120 = vmatpush1.msra.mxu0 0.0
    %121 = vmatprep.subr.mxu0 0.0
    %122 = vmatpush1.msra.mxu0 0.0
    %123 = vmatprep.subr.mxu0 0.0
    %124 = vmatpush1.msra.mxu0 0.0
    %125 = vmatprep.subr.mxu0 0.0
    %126 = vmatpush1.msra.mxu0 0.0
    %127 = vmatprep.subr.mxu0 0.0
    %128 = vmatpush1.msra.mxu0 0.0
    %129 = vmatprep.subr.mxu0 0.0
    %130 = vmatpush1.msra.mxu0 0.0
    %131 = vmatprep.subr.mxu0 0.0
    %132 = vmatpush1.msra.mxu0 0.0
    %133 = vmatprep.mubr.f32.mxu0 0.0
    %v134 = vand.u32 %v55, 4294901760
    %v135 = vsub.f32 %v55, %v134
    %v136 = vand.u32 %v135, 4294901760
    %v137 = vsub.f32 %v135, %v136
    %v138 = vand.u32 %v137, 4294901760
    %139 = vmatmul.mubr.f32.gmra.mrb[0].mxu0 %v138
    %v140 = vpop.f32.mrb[0].mxu0
    %v141 = vadd.f32 %v27, %v140
    %v142 = vpop.f32.mrb[0].mxu0
    %v143 = vadd.f32 %v27, %v142
    %144 = vmatprep.mubr.f32.mxu0 0.0
    %v145 = vand.u32 %v57, 4294901760
    %v146 = vsub.f32 %v57, %v145
    %v147 = vand.u32 %v146, 4294901760
    %v148 = vsub.f32 %v146, %v147
    %v149 = vand.u32 %v148, 4294901760
    %150 = vmatmul.mubr.f32.gmra.mrb[0].mxu0 %v149
    %v151 = vpop.f32.mrb[0].mxu0
    %v152 = vadd.f32 %v32, %v151
    %v153 = vpop.f32.mrb[0].mxu0
    %v154 = vadd.f32 %v32, %v153
    %155 = vmatprep.mubr.f32.mxu0 0.0
    %v156 = vand.u32 %v59, 4294901760
    %v157 = vsub.f32 %v59, %v156
    %v158 = vand.u32 %v157, 4294901760
    %v159 = vsub.f32 %v157, %v158
    %v160 = vand.u32 %v159, 4294901760
    %161 = vmatmul.mubr.f32.gmra.mrb[0].mxu0 %v160
    %v162 = vpop.f32.mrb[0].mxu0
    %v163 = vadd.f32 %v37, %v162
    %v164 = vpop.f32.mrb[0].mxu0
    %v165 = vadd.f32 %v37, %v164
    %166 = vmatprep.mubr.f32.mxu0 0.0
    %v167 = vand.u32 %v61, 4294901760
    %v168 = vsub.f32 %v61, %v167
    %v169 = vand.u32 %v168, 4294901760
    %v170 = vsub.f32 %v168, %v169
    %v171 = vand.u32 %v170, 4294901760
    %172 = vmatmul.mubr.f32.gmra.mrb[0].mxu0 %v171
    %v173 = vpop.f32.mrb[0].mxu0
    %v174 = vadd.f32 %v42, %v173
    %v175 = vpop.f32.mrb[0].mxu0
    %v176 = vadd.f32 %v42, %v175
    %177 = vmatprep.mubr.f32.mxu0 0.0
    %v178 = vand.u32 %v63, 4294901760
    %v179 = vsub.f32 %v63, %v178
    %v180 = vand.u32 %v179, 4294901760
    %v181 = vsub.f32 %v179, %v180
    %v182 = vand.u32 %v181, 4294901760
    %183 = vmatmul.mubr.f32.gmra.mrb[0].mxu0 %v182
    %v184 = vpop.f32.mrb[0].mxu0
    %v185 = vadd.f32 %v47, %v184
    %v186 = vpop.f32.mrb[0].mxu0
    %v187 = vadd.f32 %v47, %v186
    %188 = vmatprep.mubr.f32.mxu0 0.0
    %v189 = vand.u32 %v65, 4294901760
    %v190 = vsub.f32 %v65, %v189
    %v191 = vand.u32 %v190, 4294901760
    %v192 = vsub.f32 %v190, %v191
    %v193 = vand.u32 %v192, 4294901760
    %194 = vmatmul.mubr.f32.gmra.mrb[0].mxu0 %v193
    %v195 = vpop.f32.mrb[0].mxu0
    %v196 = vadd.f32 %v52, %v195
    %v197 = vpop.f32.mrb[0].mxu0
    %v198 = vadd.f32 %v52, %v197
    %199 = vdwg.mxu0
    %v200 = vand.u32 %v16, 4294901760
    %v201 = vsub.f32 %v16, %v200
    %v202 = vand.u32 %v201, 4294901760
    %v203 = vsub.f32 %v201, %v202
    %v204 = vand.u32 %v203, 4294901760
    %205 = vmatprep.subr.mxu0 %v204
    %v206 = vand.u32 %v15, 4294901760
    %v207 = vsub.f32 %v15, %v206
    %v208 = vand.u32 %v207, 4294901760
    %v209 = vsub.f32 %v207, %v208
    %v210 = vand.u32 %v209, 4294901760
    %211 = vmatpush1.msra.mxu0 %v210
    %212 = vmatprep.subr.mxu0 0.0
    %213 = vmatpush1.msra.mxu0 0.0
    %214 = vmatprep.subr.mxu0 0.0
    %215 = vmatpush1.msra.mxu0 0.0
    %216 = vmatprep.subr.mxu0 0.0
    %217 = vmatpush1.msra.mxu0 0.0
    %218 = vmatprep.subr.mxu0 0.0
    %219 = vmatpush1.msra.mxu0 0.0
    %220 = vmatprep.subr.mxu0 0.0
    %221 = vmatpush1.msra.mxu0 0.0
    %222 = vmatprep.subr.mxu0 0.0
    %223 = vmatpush1.msra.mxu0 0.0
    %224 = vmatprep.subr.mxu0 0.0
    %225 = vmatpush1.msra.mxu0 0.0
    %226 = vmatprep.subr.mxu0 0.0
    %227 = vmatpush1.msra.mxu0 0.0
    %228 = vmatprep.subr.mxu0 0.0
    %229 = vmatpush1.msra.mxu0 0.0
    %230 = vmatprep.subr.mxu0 0.0
    %231 = vmatpush1.msra.mxu0 0.0
    %232 = vmatprep.subr.mxu0 0.0
    %233 = vmatpush1.msra.mxu0 0.0
    %234 = vmatprep.subr.mxu0 0.0
    %235 = vmatpush1.msra.mxu0 0.0
    %236 = vmatprep.subr.mxu0 0.0
    %237 = vmatpush1.msra.mxu0 0.0
    %238 = vmatprep.subr.mxu0 0.0
    %239 = vmatpush1.msra.mxu0 0.0
    %240 = vmatprep.subr.mxu0 0.0
    %241 = vmatpush1.msra.mxu0 0.0
    %242 = vmatprep.subr.mxu0 0.0
    %243 = vmatpush1.msra.mxu0 0.0
    %244 = vmatprep.subr.mxu0 0.0
    %245 = vmatpush1.msra.mxu0 0.0
    %246 = vmatprep.subr.mxu0 0.0
    %247 = vmatpush1.msra.mxu0 0.0
    %248 = vmatprep.subr.mxu0 0.0
    %249 = vmatpush1.msra.mxu0 0.0
    %250 = vmatprep.subr.mxu0 0.0
    %251 = vmatpush1.msra.mxu0 0.0
    %252 = vmatprep.subr.mxu0 0.0
    %253 = vmatpush1.msra.mxu0 0.0
    %254 = vmatprep.subr.mxu0 0.0
    %255 = vmatpush1.msra.mxu0 0.0
    %256 = vmatprep.subr.mxu0 0.0
    %257 = vmatpush1.msra.mxu0 0.0
    %258 = vmatprep.subr.mxu0 0.0
    %259 = vmatpush1.msra.mxu0 0.0
    %260 = vmatprep.subr.mxu0 0.0
    %261 = vmatpush1.msra.mxu0 0.0
    %262 = vmatprep.subr.mxu0 0.0
    %263 = vmatpush1.msra.mxu0 0.0
    %264 = vmatprep.subr.mxu0 0.0
    %265 = vmatpush1.msra.mxu0 0.0
    %266 = vmatprep.subr.mxu0 0.0
    %267 = vmatpush1.msra.mxu0 0.0
    %268 = vmatprep.subr.mxu0 0.0
    %269 = vmatpush1.msra.mxu0 0.0
    %270 = vmatprep.subr.mxu0 0.0
    %271 = vmatpush1.msra.mxu0 0.0
    %272 = vmatprep.subr.mxu0 0.0
    %273 = vmatpush1.msra.mxu0 0.0
    %274 = vmatprep.mubr.f32.mxu0 0.0
    %v275 = vand.u32 %v55, 4294901760
    %276 = vmatmul.mubr.f32.gmra.mrb[0].mxu0 %v275
    %v277 = vpop.f32.mrb[0].mxu0
    %v278 = vadd.f32 %v141, %v277
    %v279 = vpop.f32.mrb[0].mxu0
    %v280 = vadd.f32 %v143, %v279
    %281 = vmatprep.mubr.f32.mxu0 0.0
    %v282 = vand.u32 %v57, 4294901760
    %283 = vmatmul.mubr.f32.gmra.mrb[0].mxu0 %v282
    %v284 = vpop.f32.mrb[0].mxu0
    %v285 = vadd.f32 %v152, %v284
    %v286 = vpop.f32.mrb[0].mxu0
    %v287 = vadd.f32 %v154, %v286
    %288 = vmatprep.mubr.f32.mxu0 0.0
    %v289 = vand.u32 %v59, 4294901760
    %290 = vmatmul.mubr.f32.gmra.mrb[0].mxu0 %v289
    %v291 = vpop.f32.mrb[0].mxu0
    %v292 = vadd.f32 %v163, %v291
    %v293 = vpop.f32.mrb[0].mxu0
    %v294 = vadd.f32 %v165, %v293
    %295 = vmatprep.mubr.f32.mxu0 0.0
    %v296 = vand.u32 %v61, 4294901760
    %297 = vmatmul.mubr.f32.gmra.mrb[0].mxu0 %v296
    %v298 = vpop.f32.mrb[0].mxu0
    %v299 = vadd.f32 %v174, %v298
    %v300 = vpop.f32.mrb[0].mxu0
    %v301 = vadd.f32 %v176, %v300
    %302 = vmatprep.mubr.f32.mxu0 0.0
    %v303 = vand.u32 %v63, 4294901760
    %304 = vmatmul.mubr.f32.gmra.mrb[0].mxu0 %v303
    %v305 = vpop.f32.mrb[0].mxu0
    %v306 = vadd.f32 %v185, %v305
    %v307 = vpop.f32.mrb[0].mxu0
    %v308 = vadd.f32 %v187, %v307
    %309 = vmatprep.mubr.f32.mxu0 0.0
    %v310 = vand.u32 %v65, 4294901760
    %311 = vmatmul.mubr.f32.gmra.mrb[0].mxu0 %v310
    %v312 = vpop.f32.mrb[0].mxu0
    %v313 = vadd.f32 %v196, %v312
    %v314 = vpop.f32.mrb[0].mxu0
    %v315 = vadd.f32 %v198, %v314
    %316 = vdwg.mxu0
    %v317 = vand.u32 %v16, 4294901760
    %v318 = vsub.f32 %v16, %v317
    %319 = vmatprep.subr.mxu0 %v318
    %v320 = vand.u32 %v15, 4294901760
    %v321 = vsub.f32 %v15, %v320
    %322 = vmatpush1.msra.mxu0 %v321
    %323 = vmatprep.subr.mxu0 0.0
    %324 = vmatpush1.msra.mxu0 0.0
    %325 = vmatprep.subr.mxu0 0.0
    %326 = vmatpush1.msra.mxu0 0.0
    %327 = vmatprep.subr.mxu0 0.0
    %328 = vmatpush1.msra.mxu0 0.0
    %329 = vmatprep.subr.mxu0 0.0
    %330 = vmatpush1.msra.mxu0 0.0
    %331 = vmatprep.subr.mxu0 0.0
    %332 = vmatpush1.msra.mxu0 0.0
    %333 = vmatprep.subr.mxu0 0.0
    %334 = vmatpush1.msra.mxu0 0.0
    %335 = vmatprep.subr.mxu0 0.0
    %336 = vmatpush1.msra.mxu0 0.0
    %337 = vmatprep.subr.mxu0 0.0
    %338 = vmatpush1.msra.mxu0 0.0
    %339 = vmatprep.subr.mxu0 0.0
    %340 = vmatpush1.msra.mxu0 0.0
    %341 = vmatprep.subr.mxu0 0.0
    %342 = vmatpush1.msra.mxu0 0.0
    %343 = vmatprep.subr.mxu0 0.0
    %344 = vmatpush1.msra.mxu0 0.0
    %345 = vmatprep.subr.mxu0 0.0
    %346 = vmatpush1.msra.mxu0 0.0
    %347 = vmatprep.subr.mxu0 0.0
    %348 = vmatpush1.msra.mxu0 0.0
    %349 = vmatprep.subr.mxu0 0.0
    %350 = vmatpush1.msra.mxu0 0.0
    %351 = vmatprep.subr.mxu0 0.0
    %352 = vmatpush1.msra.mxu0 0.0
    %353 = vmatprep.subr.mxu0 0.0
    %354 = vmatpush1.msra.mxu0 0.0
    %355 = vmatprep.subr.mxu0 0.0
    %356 = vmatpush1.msra.mxu0 0.0
    %357 = vmatprep.subr.mxu0 0.0
    %358 = vmatpush1.msra.mxu0 0.0
    %359 = vmatprep.subr.mxu0 0.0
    %360 = vmatpush1.msra.mxu0 0.0
    %361 = vmatprep.subr.mxu0 0.0
    %362 = vmatpush1.msra.mxu0 0.0
    %363 = vmatprep.subr.mxu0 0.0
    %364 = vmatpush1.msra.mxu0 0.0
    %365 = vmatprep.subr.mxu0 0.0
    %366 = vmatpush1.msra.mxu0 0.0
    %367 = vmatprep.subr.mxu0 0.0
    %368 = vmatpush1.msra.mxu0 0.0
    %369 = vmatprep.subr.mxu0 0.0
    %370 = vmatpush1.msra.mxu0 0.0
    %371 = vmatprep.subr.mxu0 0.0
    %372 = vmatpush1.msra.mxu0 0.0
    %373 = vmatprep.subr.mxu0 0.0
    %374 = vmatpush1.msra.mxu0 0.0
    %375 = vmatprep.subr.mxu0 0.0
    %376 = vmatpush1.msra.mxu0 0.0
    %377 = vmatprep.subr.mxu0 0.0
    %378 = vmatpush1.msra.mxu0 0.0
    %379 = vmatprep.subr.mxu0 0.0
    %380 = vmatpush1.msra.mxu0 0.0
    %381 = vmatprep.subr.mxu0 0.0
    %382 = vmatpush1.msra.mxu0 0.0
    %383 = vmatprep.subr.mxu0 0.0
    %384 = vmatpush1.msra.mxu0 0.0
    %385 = vmatprep.mubr.f32.mxu0 0.0
    %v386 = vand.u32 %v55, 4294901760
    %v387 = vsub.f32 %v55, %v386
    %388 = vmatmul.mubr.f32.gmra.mrb[0].mxu0 %v387
    %v389 = vpop.f32.mrb[0].mxu0
    %v390 = vadd.f32 %v278, %v389
    %v391 = vpop.f32.mrb[0].mxu0
    %v392 = vadd.f32 %v280, %v391
    %393 = vmatprep.mubr.f32.mxu0 0.0
    %v394 = vand.u32 %v57, 4294901760
    %v395 = vsub.f32 %v57, %v394
    %396 = vmatmul.mubr.f32.gmra.mrb[0].mxu0 %v395
    %v397 = vpop.f32.mrb[0].mxu0
    %v398 = vadd.f32 %v285, %v397
    %v399 = vpop.f32.mrb[0].mxu0
    %v400 = vadd.f32 %v287, %v399
    %401 = vmatprep.mubr.f32.mxu0 0.0
    %v402 = vand.u32 %v59, 4294901760
    %v403 = vsub.f32 %v59, %v402
    %404 = vmatmul.mubr.f32.gmra.mrb[0].mxu0 %v403
    %v405 = vpop.f32.mrb[0].mxu0
    %v406 = vadd.f32 %v292, %v405
    %v407 = vpop.f32.mrb[0].mxu0
    %v408 = vadd.f32 %v294, %v407
    %409 = vmatprep.mubr.f32.mxu0 0.0
    %v410 = vand.u32 %v61, 4294901760
    %v411 = vsub.f32 %v61, %v410
    %412 = vmatmul.mubr.f32.gmra.mrb[0].mxu0 %v411
    %v413 = vpop.f32.mrb[0].mxu0
    %v414 = vadd.f32 %v299, %v413
    %v415 = vpop.f32.mrb[0].mxu0
    %v416 = vadd.f32 %v301, %v415
    %417 = vmatprep.mubr.f32.mxu0 0.0
    %v418 = vand.u32 %v63, 4294901760
    %v419 = vsub.f32 %v63, %v418
    %420 = vmatmul.mubr.f32.gmra.mrb[0].mxu0 %v419
    %v421 = vpop.f32.mrb[0].mxu0
    %v422 = vadd.f32 %v306, %v421
    %v423 = vpop.f32.mrb[0].mxu0
    %v424 = vadd.f32 %v308, %v423
    %425 = vmatprep.mubr.f32.mxu0 0.0
    %v426 = vand.u32 %v65, 4294901760
    %v427 = vsub.f32 %v65, %v426
    %428 = vmatmul.mubr.f32.gmra.mrb[0].mxu0 %v427
    %v429 = vpop.f32.mrb[0].mxu0
    %v430 = vadd.f32 %v313, %v429
    %v431 = vpop.f32.mrb[0].mxu0
    %v432 = vadd.f32 %v315, %v431
    %433 = vdwg.mxu0
    %v434 = vand.u32 %v16, 4294901760
    %435 = vmatprep.subr.mxu0 %v434
    %v436 = vand.u32 %v15, 4294901760
    %437 = vmatpush1.msra.mxu0 %v436
    %438 = vmatprep.subr.mxu0 0.0
    %439 = vmatpush1.msra.mxu0 0.0
    %440 = vmatprep.subr.mxu0 0.0
    %441 = vmatpush1.msra.mxu0 0.0
    %442 = vmatprep.subr.mxu0 0.0
    %443 = vmatpush1.msra.mxu0 0.0
    %444 = vmatprep.subr.mxu0 0.0
    %445 = vmatpush1.msra.mxu0 0.0
    %446 = vmatprep.subr.mxu0 0.0
    %447 = vmatpush1.msra.mxu0 0.0
    %448 = vmatprep.subr.mxu0 0.0
    %449 = vmatpush1.msra.mxu0 0.0
    %450 = vmatprep.subr.mxu0 0.0
    %451 = vmatpush1.msra.mxu0 0.0
    %452 = vmatprep.subr.mxu0 0.0
    %453 = vmatpush1.msra.mxu0 0.0
    %454 = vmatprep.subr.mxu0 0.0
    %455 = vmatpush1.msra.mxu0 0.0
    %456 = vmatprep.subr.mxu0 0.0
    %457 = vmatpush1.msra.mxu0 0.0
    %458 = vmatprep.subr.mxu0 0.0
    %459 = vmatpush1.msra.mxu0 0.0
    %460 = vmatprep.subr.mxu0 0.0
    %461 = vmatpush1.msra.mxu0 0.0
    %462 = vmatprep.subr.mxu0 0.0
    %463 = vmatpush1.msra.mxu0 0.0
    %464 = vmatprep.subr.mxu0 0.0
    %465 = vmatpush1.msra.mxu0 0.0
    %466 = vmatprep.subr.mxu0 0.0
    %467 = vmatpush1.msra.mxu0 0.0
    %468 = vmatprep.subr.mxu0 0.0
    %469 = vmatpush1.msra.mxu0 0.0
    %470 = vmatprep.subr.mxu0 0.0
    %471 = vmatpush1.msra.mxu0 0.0
    %472 = vmatprep.subr.mxu0 0.0
    %473 = vmatpush1.msra.mxu0 0.0
    %474 = vmatprep.subr.mxu0 0.0
    %475 = vmatpush1.msra.mxu0 0.0
    %476 = vmatprep.subr.mxu0 0.0
    %477 = vmatpush1.msra.mxu0 0.0
    %478 = vmatprep.subr.mxu0 0.0
    %479 = vmatpush1.msra.mxu0 0.0
    %480 = vmatprep.subr.mxu0 0.0
    %481 = vmatpush1.msra.mxu0 0.0
    %482 = vmatprep.subr.mxu0 0.0
    %483 = vmatpush1.msra.mxu0 0.0
    %484 = vmatprep.subr.mxu0 0.0
    %485 = vmatpush1.msra.mxu0 0.0
    %486 = vmatprep.subr.mxu0 0.0
    %487 = vmatpush1.msra.mxu0 0.0
    %488 = vmatprep.subr.mxu0 0.0
    %489 = vmatpush1.msra.mxu0 0.0
    %490 = vmatprep.subr.mxu0 0.0
    %491 = vmatpush1.msra.mxu0 0.0
    %492 = vmatprep.subr.mxu0 0.0
    %493 = vmatpush1.msra.mxu0 0.0
    %494 = vmatprep.subr.mxu0 0.0
    %495 = vmatpush1.msra.mxu0 0.0
    %496 = vmatprep.subr.mxu0 0.0
    %497 = vmatpush1.msra.mxu0 0.0
    %498 = vmatprep.subr.mxu0 0.0
    %499 = vmatpush1.msra.mxu0 0.0
    %500 = vmatprep.mubr.f32.mxu0 0.0
    %v501 = vand.u32 %v55, 4294901760
    %v502 = vsub.f32 %v55, %v501
    %v503 = vand.u32 %v502, 4294901760
    %504 = vmatmul.mubr.f32.gmra.mrb[0].mxu0 %v503
    %v505 = vpop.f32.mrb[0].mxu0
    %v506 = vadd.f32 %v390, %v505
    %v507 = vpop.f32.mrb[0].mxu0
    %v508 = vadd.f32 %v392, %v507
    %509 = vmatprep.mubr.f32.mxu0 0.0
    %v510 = vand.u32 %v57, 4294901760
    %v511 = vsub.f32 %v57, %v510
    %v512 = vand.u32 %v511, 4294901760
    %513 = vmatmul.mubr.f32.gmra.mrb[0].mxu0 %v512
    %v514 = vpop.f32.mrb[0].mxu0
    %v515 = vadd.f32 %v398, %v514
    %v516 = vpop.f32.mrb[0].mxu0
    %v517 = vadd.f32 %v400, %v516
    %518 = vmatprep.mubr.f32.mxu0 0.0
    %v519 = vand.u32 %v59, 4294901760
    %v520 = vsub.f32 %v59, %v519
    %v521 = vand.u32 %v520, 4294901760
    %522 = vmatmul.mubr.f32.gmra.mrb[0].mxu0 %v521
    %v523 = vpop.f32.mrb[0].mxu0
    %v524 = vadd.f32 %v406, %v523
    %v525 = vpop.f32.mrb[0].mxu0
    %v526 = vadd.f32 %v408, %v525
    %527 = vmatprep.mubr.f32.mxu0 0.0
    %v528 = vand.u32 %v61, 4294901760
    %v529 = vsub.f32 %v61, %v528
    %v530 = vand.u32 %v529, 4294901760
    %531 = vmatmul.mubr.f32.gmra.mrb[0].mxu0 %v530
    %v532 = vpop.f32.mrb[0].mxu0
    %v533 = vadd.f32 %v414, %v532
    %v534 = vpop.f32.mrb[0].mxu0
    %v535 = vadd.f32 %v416, %v534
    %536 = vmatprep.mubr.f32.mxu0 0.0
    %v537 = vand.u32 %v63, 4294901760
    %v538 = vsub.f32 %v63, %v537
    %v539 = vand.u32 %v538, 4294901760
    %540 = vmatmul.mubr.f32.gmra.mrb[0].mxu0 %v539
    %v541 = vpop.f32.mrb[0].mxu0
    %v542 = vadd.f32 %v422, %v541
    %v543 = vpop.f32.mrb[0].mxu0
    %v544 = vadd.f32 %v424, %v543
    %545 = vmatprep.mubr.f32.mxu0 0.0
    %v546 = vand.u32 %v65, 4294901760
    %v547 = vsub.f32 %v65, %v546
    %v548 = vand.u32 %v547, 4294901760
    %549 = vmatmul.mubr.f32.gmra.mrb[0].mxu0 %v548
    %v550 = vpop.f32.mrb[0].mxu0
    %v551 = vadd.f32 %v430, %v550
    %v552 = vpop.f32.mrb[0].mxu0
    %v553 = vadd.f32 %v432, %v552
    %554 = vdwg.mxu0
    %v555 = vand.u32 %v16, 4294901760
    %v556 = vsub.f32 %v16, %v555
    %v557 = vand.u32 %v556, 4294901760
    %558 = vmatprep.subr.mxu0 %v557
    %v559 = vand.u32 %v15, 4294901760
    %v560 = vsub.f32 %v15, %v559
    %v561 = vand.u32 %v560, 4294901760
    %562 = vmatpush1.msra.mxu0 %v561
    %563 = vmatprep.subr.mxu0 0.0
    %564 = vmatpush1.msra.mxu0 0.0
    %565 = vmatprep.subr.mxu0 0.0
    %566 = vmatpush1.msra.mxu0 0.0
    %567 = vmatprep.subr.mxu0 0.0
    %568 = vmatpush1.msra.mxu0 0.0
    %569 = vmatprep.subr.mxu0 0.0
    %570 = vmatpush1.msra.mxu0 0.0
    %571 = vmatprep.subr.mxu0 0.0
    %572 = vmatpush1.msra.mxu0 0.0
    %573 = vmatprep.subr.mxu0 0.0
    %574 = vmatpush1.msra.mxu0 0.0
    %575 = vmatprep.subr.mxu0 0.0
    %576 = vmatpush1.msra.mxu0 0.0
    %577 = vmatprep.subr.mxu0 0.0
    %578 = vmatpush1.msra.mxu0 0.0
    %579 = vmatprep.subr.mxu0 0.0
    %580 = vmatpush1.msra.mxu0 0.0
    %581 = vmatprep.subr.mxu0 0.0
    %582 = vmatpush1.msra.mxu0 0.0
    %583 = vmatprep.subr.mxu0 0.0
    %584 = vmatpush1.msra.mxu0 0.0
    %585 = vmatprep.subr.mxu0 0.0
    %586 = vmatpush1.msra.mxu0 0.0
    %587 = vmatprep.subr.mxu0 0.0
    %588 = vmatpush1.msra.mxu0 0.0
    %589 = vmatprep.subr.mxu0 0.0
    %590 = vmatpush1.msra.mxu0 0.0
    %591 = vmatprep.subr.mxu0 0.0
    %592 = vmatpush1.msra.mxu0 0.0
    %593 = vmatprep.subr.mxu0 0.0
    %594 = vmatpush1.msra.mxu0 0.0
    %595 = vmatprep.subr.mxu0 0.0
    %596 = vmatpush1.msra.mxu0 0.0
    %597 = vmatprep.subr.mxu0 0.0
    %598 = vmatpush1.msra.mxu0 0.0
    %599 = vmatprep.subr.mxu0 0.0
    %600 = vmatpush1.msra.mxu0 0.0
    %601 = vmatprep.subr.mxu0 0.0
    %602 = vmatpush1.msra.mxu0 0.0
    %603 = vmatprep.subr.mxu0 0.0
    %604 = vmatpush1.msra.mxu0 0.0
    %605 = vmatprep.subr.mxu0 0.0
    %606 = vmatpush1.msra.mxu0 0.0
    %607 = vmatprep.subr.mxu0 0.0
    %608 = vmatpush1.msra.mxu0 0.0
    %609 = vmatprep.subr.mxu0 0.0
    %610 = vmatpush1.msra.mxu0 0.0
    %611 = vmatprep.subr.mxu0 0.0
    %612 = vmatpush1.msra.mxu0 0.0
    %613 = vmatprep.subr.mxu0 0.0
    %614 = vmatpush1.msra.mxu0 0.0
    %615 = vmatprep.subr.mxu0 0.0
    %616 = vmatpush1.msra.mxu0 0.0
    %617 = vmatprep.subr.mxu0 0.0
    %618 = vmatpush1.msra.mxu0 0.0
    %619 = vmatprep.subr.mxu0 0.0
    %620 = vmatpush1.msra.mxu0 0.0
    %621 = vmatprep.subr.mxu0 0.0
    %622 = vmatpush1.msra.mxu0 0.0
    %623 = vmatprep.subr.mxu0 0.0
    %624 = vmatpush1.msra.mxu0 0.0
    %625 = vmatprep.mubr.f32.mxu0 0.0
    %v626 = vand.u32 %v55, 4294901760
    %627 = vmatmul.mubr.f32.gmra.mrb[0].mxu0 %v626
    %v628 = vpop.f32.mrb[0].mxu0
    %v629 = vadd.f32 %v506, %v628
    %v630 = vpop.f32.mrb[0].mxu0
    %v631 = vadd.f32 %v508, %v630
    %632 = vmatprep.mubr.f32.mxu0 0.0
    %v633 = vand.u32 %v57, 4294901760
    %634 = vmatmul.mubr.f32.gmra.mrb[0].mxu0 %v633
    %v635 = vpop.f32.mrb[0].mxu0
    %v636 = vadd.f32 %v515, %v635
    %v637 = vpop.f32.mrb[0].mxu0
    %v638 = vadd.f32 %v517, %v637
    %639 = vmatprep.mubr.f32.mxu0 0.0
    %v640 = vand.u32 %v59, 4294901760
    %641 = vmatmul.mubr.f32.gmra.mrb[0].mxu0 %v640
    %v642 = vpop.f32.mrb[0].mxu0
    %v643 = vadd.f32 %v524, %v642
    %v644 = vpop.f32.mrb[0].mxu0
    %v645 = vadd.f32 %v526, %v644
    %646 = vmatprep.mubr.f32.mxu0 0.0
    %v647 = vand.u32 %v61, 4294901760
    %648 = vmatmul.mubr.f32.gmra.mrb[0].mxu0 %v647
    %v649 = vpop.f32.mrb[0].mxu0
    %v650 = vadd.f32 %v533, %v649
    %v651 = vpop.f32.mrb[0].mxu0
    %v652 = vadd.f32 %v535, %v651
    %653 = vmatprep.mubr.f32.mxu0 0.0
    %v654 = vand.u32 %v63, 4294901760
    %655 = vmatmul.mubr.f32.gmra.mrb[0].mxu0 %v654
    %v656 = vpop.f32.mrb[0].mxu0
    %v657 = vadd.f32 %v542, %v656
    %v658 = vpop.f32.mrb[0].mxu0
    %v659 = vadd.f32 %v544, %v658
    %660 = vmatprep.mubr.f32.mxu0 0.0
    %v661 = vand.u32 %v65, 4294901760
    %662 = vmatmul.mubr.f32.gmra.mrb[0].mxu0 %v661
    %v663 = vpop.f32.mrb[0].mxu0
    %v664 = vadd.f32 %v551, %v663
    %v665 = vpop.f32.mrb[0].mxu0
    %v666 = vadd.f32 %v553, %v665
    %667 = vdwg.mxu0
    %v668 = vand.u32 %v16, 4294901760
    %669 = vmatprep.subr.mxu0 %v668
    %v670 = vand.u32 %v15, 4294901760
    %671 = vmatpush1.msra.mxu0 %v670
    %672 = vmatprep.subr.mxu0 0.0
    %673 = vmatpush1.msra.mxu0 0.0
    %674 = vmatprep.subr.mxu0 0.0
    %675 = vmatpush1.msra.mxu0 0.0
    %676 = vmatprep.subr.mxu0 0.0
    %677 = vmatpush1.msra.mxu0 0.0
    %678 = vmatprep.subr.mxu0 0.0
    %679 = vmatpush1.msra.mxu0 0.0
    %680 = vmatprep.subr.mxu0 0.0
    %681 = vmatpush1.msra.mxu0 0.0
    %682 = vmatprep.subr.mxu0 0.0
    %683 = vmatpush1.msra.mxu0 0.0
    %684 = vmatprep.subr.mxu0 0.0
    %685 = vmatpush1.msra.mxu0 0.0
    %686 = vmatprep.subr.mxu0 0.0
    %687 = vmatpush1.msra.mxu0 0.0
    %688 = vmatprep.subr.mxu0 0.0
    %689 = vmatpush1.msra.mxu0 0.0
    %690 = vmatprep.subr.mxu0 0.0
    %691 = vmatpush1.msra.mxu0 0.0
    %692 = vmatprep.subr.mxu0 0.0
    %693 = vmatpush1.msra.mxu0 0.0
    %694 = vmatprep.subr.mxu0 0.0
    %695 = vmatpush1.msra.mxu0 0.0
    %696 = vmatprep.subr.mxu0 0.0
    %697 = vmatpush1.msra.mxu0 0.0
    %698 = vmatprep.subr.mxu0 0.0
    %699 = vmatpush1.msra.mxu0 0.0
    %700 = vmatprep.subr.mxu0 0.0
    %701 = vmatpush1.msra.mxu0 0.0
    %702 = vmatprep.subr.mxu0 0.0
    %703 = vmatpush1.msra.mxu0 0.0
    %704 = vmatprep.subr.mxu0 0.0
    %705 = vmatpush1.msra.mxu0 0.0
    %706 = vmatprep.subr.mxu0 0.0
    %707 = vmatpush1.msra.mxu0 0.0
    %708 = vmatprep.subr.mxu0 0.0
    %709 = vmatpush1.msra.mxu0 0.0
    %710 = vmatprep.subr.mxu0 0.0
    %711 = vmatpush1.msra.mxu0 0.0
    %712 = vmatprep.subr.mxu0 0.0
    %713 = vmatpush1.msra.mxu0 0.0
    %714 = vmatprep.subr.mxu0 0.0
    %715 = vmatpush1.msra.mxu0 0.0
    %716 = vmatprep.subr.mxu0 0.0
    %717 = vmatpush1.msra.mxu0 0.0
    %718 = vmatprep.subr.mxu0 0.0
    %719 = vmatpush1.msra.mxu0 0.0
    %720 = vmatprep.subr.mxu0 0.0
    %721 = vmatpush1.msra.mxu0 0.0
    %722 = vmatprep.subr.mxu0 0.0
    %723 = vmatpush1.msra.mxu0 0.0
    %724 = vmatprep.subr.mxu0 0.0
    %725 = vmatpush1.msra.mxu0 0.0
    %726 = vmatprep.subr.mxu0 0.0
    %727 = vmatpush1.msra.mxu0 0.0
    %728 = vmatprep.subr.mxu0 0.0
    %729 = vmatpush1.msra.mxu0 0.0
    %730 = vmatprep.subr.mxu0 0.0
    %731 = vmatpush1.msra.mxu0 0.0
    %732 = vmatprep.subr.mxu0 0.0
    %733 = vmatpush1.msra.mxu0 0.0
    %734 = vmatprep.mubr.f32.mxu0 0.0
    %v735 = vand.u32 %v55, 4294901760
    %736 = vmatmul.mubr.f32.gmra.mrb[0].mxu0 %v735
    %v737 = vpop.f32.mrb[0].mxu0
    %v738 = vadd.f32 %v629, %v737
    %v739 = vpop.f32.mrb[0].mxu0
    %v740 = vadd.f32 %v631, %v739
    %741 = vmatprep.mubr.f32.mxu0 0.0
    %v742 = vand.u32 %v57, 4294901760
    %743 = vmatmul.mubr.f32.gmra.mrb[0].mxu0 %v742
    %v744 = vpop.f32.mrb[0].mxu0
    %v745 = vadd.f32 %v636, %v744
    %v746 = vpop.f32.mrb[0].mxu0
    %v747 = vadd.f32 %v638, %v746
    %748 = vmatprep.mubr.f32.mxu0 0.0
    %v749 = vand.u32 %v59, 4294901760
    %750 = vmatmul.mubr.f32.gmra.mrb[0].mxu0 %v749
    %v751 = vpop.f32.mrb[0].mxu0
    %v752 = vadd.f32 %v643, %v751
    %v753 = vpop.f32.mrb[0].mxu0
    %v754 = vadd.f32 %v645, %v753
    %755 = vmatprep.mubr.f32.mxu0 0.0
    %v756 = vand.u32 %v61, 4294901760
    %757 = vmatmul.mubr.f32.gmra.mrb[0].mxu0 %v756
    %v758 = vpop.f32.mrb[0].mxu0
    %v759 = vadd.f32 %v650, %v758
    %v760 = vpop.f32.mrb[0].mxu0
    %v761 = vadd.f32 %v652, %v760
    %762 = vmatprep.mubr.f32.mxu0 0.0
    %v763 = vand.u32 %v63, 4294901760
    %764 = vmatmul.mubr.f32.gmra.mrb[0].mxu0 %v763
    %v765 = vpop.f32.mrb[0].mxu0
    %v766 = vadd.f32 %v657, %v765
    %v767 = vpop.f32.mrb[0].mxu0
    %v768 = vadd.f32 %v659, %v767
    %769 = vmatprep.mubr.f32.mxu0 0.0
    %v770 = vand.u32 %v65, 4294901760
    %771 = vmatmul.mubr.f32.gmra.mrb[0].mxu0 %v770
    %v772 = vpop.f32.mrb[0].mxu0
    %v773 = vadd.f32 %v664, %v772
    %v774 = vpop.f32.mrb[0].mxu0
    %v775 = vadd.f32 %v666, %v774
    %776 = vdwg.mxu0
    %v777 = vmax.f32 %v738, 0.0
    %v778 = vmax.f32 %v740, 0.0
    %v779 = vmax.f32 %v745, 0.0
    %v780 = vmax.f32 %v747, 0.0
    %v781 = vmax.f32 %v752, 0.0
    %v782 = vmax.f32 %v754, 0.0
    %v783 = vmax.f32 %v759, 0.0
    %v784 = vmax.f32 %v761, 0.0
    %v785 = vmax.f32 %v766, 0.0
    %v786 = vmax.f32 %v768, 0.0
    %v787 = vmax.f32 %v773, 0.0
    %v788 = vmax.f32 %v775, 0.0
    %v789 = vmin.f32 %v777, 6.0
    %v790 = vmin.f32 %v778, 6.0
    %v791 = vmin.f32 %v779, 6.0
    %v792 = vmin.f32 %v780, 6.0
    %v793 = vmin.f32 %v781, 6.0
    %v794 = vmin.f32 %v782, 6.0
    %v795 = vmin.f32 %v783, 6.0
    %v796 = vmin.f32 %v784, 6.0
    %v797 = vmin.f32 %v785, 6.0
    %v798 = vmin.f32 %v786, 6.0
    %v799 = vmin.f32 %v787, 6.0
    %v800 = vmin.f32 %v788, 6.0
    %v801 = vlaneseq
    %v802 = vand.u32 %v801, 127
    %v803 = vadd.s32 %v802, 128
    %v804 = vand.u32 %v802, 15
    %v805 = vand.u32 %v803, 15
    %vm806 = vcmp.ge.s32.totalorder %v802, 16
    %vm807 = vcmp.ge.s32.totalorder %v803, 16
    %vm808 = vcmp.lt.s32.totalorder %v802, 240
    %vm809 = vcmp.lt.s32.totalorder %v803, 240
    %vm810 = vcmp.ge.s32.totalorder %v804, 1
    %vm811 = vcmp.ge.s32.totalorder %v805, 1
    %vm812 = vcmp.le.s32.totalorder %v804, 14
    %vm813 = vcmp.le.s32.totalorder %v805, 14
    %vm814 = vmand %vm806, %vm810
    %vm815 = vmand %vm807, %vm811
    %vm816 = vmand %vm806, %vm812
    %vm817 = vmand %vm807, %vm813
    %vm818 = vmand %vm808, %vm810
    %vm819 = vmand %vm809, %vm811
    %vm820 = vmand %vm808, %vm812
    %vm821 = vmand %vm809, %vm813
    %822 = vrot.lane.b32.xlu0 %v789, 17
    %v823 = vpop.permute.xlu0 %822
    %824 = vrot.lane.b32.xlu0 %v791, 17
    %v825 = vpop.permute.xlu0 %824
    %826 = vrot.lane.b32.xlu0 %v793, 17
    %v827 = vpop.permute.xlu0 %826
    %828 = vrot.lane.b32.xlu0 %v795, 17
    %v829 = vpop.permute.xlu0 %828
    %830 = vrot.lane.b32.xlu0 %v797, 17
    %v831 = vpop.permute.xlu0 %830
    %832 = vrot.lane.b32.xlu0 %v799, 17
    %v833 = vpop.permute.xlu0 %832
    %834 = vrot.lane.b32.xlu0 %v790, 17
    %v835 = vpop.permute.xlu0 %834
    %836 = vrot.lane.b32.xlu0 %v792, 17
    %v837 = vpop.permute.xlu0 %836
    %838 = vrot.lane.b32.xlu0 %v794, 17
    %v839 = vpop.permute.xlu0 %838
    %840 = vrot.lane.b32.xlu0 %v796, 17
    %v841 = vpop.permute.xlu0 %840
    %842 = vrot.lane.b32.xlu0 %v798, 17
    %v843 = vpop.permute.xlu0 %842
    %844 = vrot.lane.b32.xlu0 %v800, 17
    %v845 = vpop.permute.xlu0 %844
    %vm846 = vcmp.lt.s32.totalorder %v802, 17
    %v847 = vsel %vm846, %v823, %v835
    %v848 = vsel %vm846, %v825, %v837
    %v849 = vsel %vm846, %v827, %v839
    %v850 = vsel %vm846, %v829, %v841
    %v851 = vsel %vm846, %v831, %v843
    %v852 = vsel %vm846, %v833, %v845
    %v853 = vsel %vm846, %v835, %v823
    %v854 = vsel %vm846, %v837, %v825
    %v855 = vsel %vm846, %v839, %v827
    %v856 = vsel %vm846, %v841, %v829
    %v857 = vsel %vm846, %v843, %v831
    %v858 = vsel %vm846, %v845, %v833
    %v859 = vsel %vm814, 1, 0
    %v860 = vsel %vm815, 1, 0
    %vm861 = vcmp.eq.s32.totalorder %v859, 1
    %vm862 = vcmp.eq.s32.totalorder %v860, 1
    %v863 = vsel %vm861, %v853, 0.0
    %v864 = vsel %vm862, %v847, 0.0
    %v865 = vsel %vm861, %v854, 0.0
    %v866 = vsel %vm862, %v848, 0.0
    %v867 = vsel %vm861, %v855, 0.0
    %v868 = vsel %vm862, %v849, 0.0
    %v869 = vsel %vm861, %v856, 0.0
    %v870 = vsel %vm862, %v850, 0.0
    %v871 = vsel %vm861, %v857, 0.0
    %v872 = vsel %vm862, %v851, 0.0
    %v873 = vsel %vm861, %v858, 0.0
    %v874 = vsel %vm862, %v852, 0.0
    %875 = vset.pattern.permute.xlu0 9
    %876 = vperm.xlu0 %875, %v17
    %v877 = vpop.permute.xlu0 %876
    %879 = vset.pattern.permute.xlu0 9
    %880 = vperm.xlu0 %879, %v18
    %v881 = vpop.permute.xlu0 %880
    %883 = vset.pattern.permute.xlu0 9
    %884 = vperm.xlu0 %883, %v19
    %v885 = vpop.permute.xlu0 %884
    %887 = vset.pattern.permute.xlu0 9
    %888 = vperm.xlu0 %887, %v20
    %v889 = vpop.permute.xlu0 %888
    %891 = vset.pattern.permute.xlu0 9
    %892 = vperm.xlu0 %891, %v21
    %v893 = vpop.permute.xlu0 %892
    %895 = vset.pattern.permute.xlu0 9
    %896 = vperm.xlu0 %895, %v22
    %v897 = vpop.permute.xlu0 %896
    %v899 = vmul.f32 %v863, %v877
    %v900 = vmul.f32 %v864, %v877
    %v901 = vmul.f32 %v865, %v881
    %v902 = vmul.f32 %v866, %v881
    %v903 = vmul.f32 %v867, %v885
    %v904 = vmul.f32 %v868, %v885
    %v905 = vmul.f32 %v869, %v889
    %v906 = vmul.f32 %v870, %v889
    %v907 = vmul.f32 %v871, %v893
    %v908 = vmul.f32 %v872, %v893
    %v909 = vmul.f32 %v873, %v897
    %v910 = vmul.f32 %v874, %v897
    %911 = vrot.lane.b32.xlu0 %v789, 16
    %v912 = vpop.permute.xlu0 %911
    %913 = vrot.lane.b32.xlu0 %v791, 16
    %v914 = vpop.permute.xlu0 %913
    %915 = vrot.lane.b32.xlu0 %v793, 16
    %v916 = vpop.permute.xlu0 %915
    %917 = vrot.lane.b32.xlu0 %v795, 16
    %v918 = vpop.permute.xlu0 %917
    %919 = vrot.lane.b32.xlu0 %v797, 16
    %v920 = vpop.permute.xlu0 %919
    %921 = vrot.lane.b32.xlu0 %v799, 16
    %v922 = vpop.permute.xlu0 %921
    %923 = vrot.lane.b32.xlu0 %v790, 16
    %v924 = vpop.permute.xlu0 %923
    %925 = vrot.lane.b32.xlu0 %v792, 16
    %v926 = vpop.permute.xlu0 %925
    %927 = vrot.lane.b32.xlu0 %v794, 16
    %v928 = vpop.permute.xlu0 %927
    %929 = vrot.lane.b32.xlu0 %v796, 16
    %v930 = vpop.permute.xlu0 %929
    %931 = vrot.lane.b32.xlu0 %v798, 16
    %v932 = vpop.permute.xlu0 %931
    %933 = vrot.lane.b32.xlu0 %v800, 16
    %v934 = vpop.permute.xlu0 %933
    %vm935 = vcmp.lt.s32.totalorder %v802, 16
    %v936 = vsel %vm935, %v912, %v924
    %v937 = vsel %vm935, %v914, %v926
    %v938 = vsel %vm935, %v916, %v928
    %v939 = vsel %vm935, %v918, %v930
    %v940 = vsel %vm935, %v920, %v932
    %v941 = vsel %vm935, %v922, %v934
    %v942 = vsel %vm935, %v924, %v912
    %v943 = vsel %vm935, %v926, %v914
    %v944 = vsel %vm935, %v928, %v916
    %v945 = vsel %vm935, %v930, %v918
    %v946 = vsel %vm935, %v932, %v920
    %v947 = vsel %vm935, %v934, %v922
    %v948 = vsel %vm806, 1, 0
    %v949 = vsel %vm807, 1, 0
    %vm950 = vcmp.eq.s32.totalorder %v948, 1
    %vm951 = vcmp.eq.s32.totalorder %v949, 1
    %v952 = vsel %vm950, %v942, 0.0
    %v953 = vsel %vm951, %v936, 0.0
    %v954 = vsel %vm950, %v943, 0.0
    %v955 = vsel %vm951, %v937, 0.0
    %v956 = vsel %vm950, %v944, 0.0
    %v957 = vsel %vm951, %v938, 0.0
    %v958 = vsel %vm950, %v945, 0.0
    %v959 = vsel %vm951, %v939, 0.0
    %v960 = vsel %vm950, %v946, 0.0
    %v961 = vsel %vm951, %v940, 0.0
    %v962 = vsel %vm950, %v947, 0.0
    %v963 = vsel %vm951, %v941, 0.0
    %964 = vset.pattern.permute.xlu0 10
    %965 = vperm.xlu0 %964, %v17
    %v966 = vpop.permute.xlu0 %965
    %968 = vset.pattern.permute.xlu0 10
    %969 = vperm.xlu0 %968, %v18
    %v970 = vpop.permute.xlu0 %969
    %972 = vset.pattern.permute.xlu0 10
    %973 = vperm.xlu0 %972, %v19
    %v974 = vpop.permute.xlu0 %973
    %976 = vset.pattern.permute.xlu0 10
    %977 = vperm.xlu0 %976, %v20
    %v978 = vpop.permute.xlu0 %977
    %980 = vset.pattern.permute.xlu0 10
    %981 = vperm.xlu0 %980, %v21
    %v982 = vpop.permute.xlu0 %981
    %984 = vset.pattern.permute.xlu0 10
    %985 = vperm.xlu0 %984, %v22
    %v986 = vpop.permute.xlu0 %985
    %v988 = vmul.f32 %v952, %v966
    %v989 = vmul.f32 %v953, %v966
    %v990 = vmul.f32 %v954, %v970
    %v991 = vmul.f32 %v955, %v970
    %v992 = vmul.f32 %v956, %v974
    %v993 = vmul.f32 %v957, %v974
    %v994 = vmul.f32 %v958, %v978
    %v995 = vmul.f32 %v959, %v978
    %v996 = vmul.f32 %v960, %v982
    %v997 = vmul.f32 %v961, %v982
    %v998 = vmul.f32 %v962, %v986
    %v999 = vmul.f32 %v963, %v986
    %1000 = vrot.lane.b32.xlu0 %v789, 15
    %v1001 = vpop.permute.xlu0 %1000
    %1002 = vrot.lane.b32.xlu0 %v791, 15
    %v1003 = vpop.permute.xlu0 %1002
    %1004 = vrot.lane.b32.xlu0 %v793, 15
    %v1005 = vpop.permute.xlu0 %1004
    %1006 = vrot.lane.b32.xlu0 %v795, 15
    %v1007 = vpop.permute.xlu0 %1006
    %1008 = vrot.lane.b32.xlu0 %v797, 15
    %v1009 = vpop.permute.xlu0 %1008
    %1010 = vrot.lane.b32.xlu0 %v799, 15
    %v1011 = vpop.permute.xlu0 %1010
    %1012 = vrot.lane.b32.xlu0 %v790, 15
    %v1013 = vpop.permute.xlu0 %1012
    %1014 = vrot.lane.b32.xlu0 %v792, 15
    %v1015 = vpop.permute.xlu0 %1014
    %1016 = vrot.lane.b32.xlu0 %v794, 15
    %v1017 = vpop.permute.xlu0 %1016
    %1018 = vrot.lane.b32.xlu0 %v796, 15
    %v1019 = vpop.permute.xlu0 %1018
    %1020 = vrot.lane.b32.xlu0 %v798, 15
    %v1021 = vpop.permute.xlu0 %1020
    %1022 = vrot.lane.b32.xlu0 %v800, 15
    %v1023 = vpop.permute.xlu0 %1022
    %vm1024 = vcmp.lt.s32.totalorder %v802, 15
    %v1025 = vsel %vm1024, %v1001, %v1013
    %v1026 = vsel %vm1024, %v1003, %v1015
    %v1027 = vsel %vm1024, %v1005, %v1017
    %v1028 = vsel %vm1024, %v1007, %v1019
    %v1029 = vsel %vm1024, %v1009, %v1021
    %v1030 = vsel %vm1024, %v1011, %v1023
    %v1031 = vsel %vm1024, %v1013, %v1001
    %v1032 = vsel %vm1024, %v1015, %v1003
    %v1033 = vsel %vm1024, %v1017, %v1005
    %v1034 = vsel %vm1024, %v1019, %v1007
    %v1035 = vsel %vm1024, %v1021, %v1009
    %v1036 = vsel %vm1024, %v1023, %v1011
    %v1037 = vsel %vm816, 1, 0
    %v1038 = vsel %vm817, 1, 0
    %vm1039 = vcmp.eq.s32.totalorder %v1037, 1
    %vm1040 = vcmp.eq.s32.totalorder %v1038, 1
    %v1041 = vsel %vm1039, %v1031, 0.0
    %v1042 = vsel %vm1040, %v1025, 0.0
    %v1043 = vsel %vm1039, %v1032, 0.0
    %v1044 = vsel %vm1040, %v1026, 0.0
    %v1045 = vsel %vm1039, %v1033, 0.0
    %v1046 = vsel %vm1040, %v1027, 0.0
    %v1047 = vsel %vm1039, %v1034, 0.0
    %v1048 = vsel %vm1040, %v1028, 0.0
    %v1049 = vsel %vm1039, %v1035, 0.0
    %v1050 = vsel %vm1040, %v1029, 0.0
    %v1051 = vsel %vm1039, %v1036, 0.0
    %v1052 = vsel %vm1040, %v1030, 0.0
    %1053 = vset.pattern.permute.xlu0 11
    %1054 = vperm.xlu0 %1053, %v17
    %v1055 = vpop.permute.xlu0 %1054
    %1057 = vset.pattern.permute.xlu0 11
    %1058 = vperm.xlu0 %1057, %v18
    %v1059 = vpop.permute.xlu0 %1058
    %1061 = vset.pattern.permute.xlu0 11
    %1062 = vperm.xlu0 %1061, %v19
    %v1063 = vpop.permute.xlu0 %1062
    %1065 = vset.pattern.permute.xlu0 11
    %1066 = vperm.xlu0 %1065, %v20
    %v1067 = vpop.permute.xlu0 %1066
    %1069 = vset.pattern.permute.xlu0 11
    %1070 = vperm.xlu0 %1069, %v21
    %v1071 = vpop.permute.xlu0 %1070
    %1073 = vset.pattern.permute.xlu0 11
    %1074 = vperm.xlu0 %1073, %v22
    %v1075 = vpop.permute.xlu0 %1074
    %v1077 = vmul.f32 %v1041, %v1055
    %v1078 = vmul.f32 %v1042, %v1055
    %v1079 = vmul.f32 %v1043, %v1059
    %v1080 = vmul.f32 %v1044, %v1059
    %v1081 = vmul.f32 %v1045, %v1063
    %v1082 = vmul.f32 %v1046, %v1063
    %v1083 = vmul.f32 %v1047, %v1067
    %v1084 = vmul.f32 %v1048, %v1067
    %v1085 = vmul.f32 %v1049, %v1071
    %v1086 = vmul.f32 %v1050, %v1071
    %v1087 = vmul.f32 %v1051, %v1075
    %v1088 = vmul.f32 %v1052, %v1075
    %1089 = vrot.lane.b32.xlu0 %v789, 1
    %v1090 = vpop.permute.xlu0 %1089
    %1091 = vrot.lane.b32.xlu0 %v791, 1
    %v1092 = vpop.permute.xlu0 %1091
    %1093 = vrot.lane.b32.xlu0 %v793, 1
    %v1094 = vpop.permute.xlu0 %1093
    %1095 = vrot.lane.b32.xlu0 %v795, 1
    %v1096 = vpop.permute.xlu0 %1095
    %1097 = vrot.lane.b32.xlu0 %v797, 1
    %v1098 = vpop.permute.xlu0 %1097
    %1099 = vrot.lane.b32.xlu0 %v799, 1
    %v1100 = vpop.permute.xlu0 %1099
    %1101 = vrot.lane.b32.xlu0 %v790, 1
    %v1102 = vpop.permute.xlu0 %1101
    %1103 = vrot.lane.b32.xlu0 %v792, 1
    %v1104 = vpop.permute.xlu0 %1103
    %1105 = vrot.lane.b32.xlu0 %v794, 1
    %v1106 = vpop.permute.xlu0 %1105
    %1107 = vrot.lane.b32.xlu0 %v796, 1
    %v1108 = vpop.permute.xlu0 %1107
    %1109 = vrot.lane.b32.xlu0 %v798, 1
    %v1110 = vpop.permute.xlu0 %1109
    %1111 = vrot.lane.b32.xlu0 %v800, 1
    %v1112 = vpop.permute.xlu0 %1111
    %vm1113 = vcmp.lt.s32.totalorder %v802, 1
    %v1114 = vsel %vm1113, %v1090, %v1102
    %v1115 = vsel %vm1113, %v1092, %v1104
    %v1116 = vsel %vm1113, %v1094, %v1106
    %v1117 = vsel %vm1113, %v1096, %v1108
    %v1118 = vsel %vm1113, %v1098, %v1110
    %v1119 = vsel %vm1113, %v1100, %v1112
    %v1120 = vsel %vm1113, %v1102, %v1090
    %v1121 = vsel %vm1113, %v1104, %v1092
    %v1122 = vsel %vm1113, %v1106, %v1094
    %v1123 = vsel %vm1113, %v1108, %v1096
    %v1124 = vsel %vm1113, %v1110, %v1098
    %v1125 = vsel %vm1113, %v1112, %v1100
    %v1126 = vsel %vm810, 1, 0
    %v1127 = vsel %vm811, 1, 0
    %vm1128 = vcmp.eq.s32.totalorder %v1126, 1
    %vm1129 = vcmp.eq.s32.totalorder %v1127, 1
    %v1130 = vsel %vm1128, %v1120, 0.0
    %v1131 = vsel %vm1129, %v1114, 0.0
    %v1132 = vsel %vm1128, %v1121, 0.0
    %v1133 = vsel %vm1129, %v1115, 0.0
    %v1134 = vsel %vm1128, %v1122, 0.0
    %v1135 = vsel %vm1129, %v1116, 0.0
    %v1136 = vsel %vm1128, %v1123, 0.0
    %v1137 = vsel %vm1129, %v1117, 0.0
    %v1138 = vsel %vm1128, %v1124, 0.0
    %v1139 = vsel %vm1129, %v1118, 0.0
    %v1140 = vsel %vm1128, %v1125, 0.0
    %v1141 = vsel %vm1129, %v1119, 0.0
    %1142 = vset.pattern.permute.xlu0 12
    %1143 = vperm.xlu0 %1142, %v17
    %v1144 = vpop.permute.xlu0 %1143
    %1146 = vset.pattern.permute.xlu0 12
    %1147 = vperm.xlu0 %1146, %v18
    %v1148 = vpop.permute.xlu0 %1147
    %1150 = vset.pattern.permute.xlu0 12
    %1151 = vperm.xlu0 %1150, %v19
    %v1152 = vpop.permute.xlu0 %1151
    %1154 = vset.pattern.permute.xlu0 12
    %1155 = vperm.xlu0 %1154, %v20
    %v1156 = vpop.permute.xlu0 %1155
    %1158 = vset.pattern.permute.xlu0 12
    %1159 = vperm.xlu0 %1158, %v21
    %v1160 = vpop.permute.xlu0 %1159
    %1162 = vset.pattern.permute.xlu0 12
    %1163 = vperm.xlu0 %1162, %v22
    %v1164 = vpop.permute.xlu0 %1163
    %v1166 = vmul.f32 %v1130, %v1144
    %v1167 = vmul.f32 %v1131, %v1144
    %v1168 = vmul.f32 %v1132, %v1148
    %v1169 = vmul.f32 %v1133, %v1148
    %v1170 = vmul.f32 %v1134, %v1152
    %v1171 = vmul.f32 %v1135, %v1152
    %v1172 = vmul.f32 %v1136, %v1156
    %v1173 = vmul.f32 %v1137, %v1156
    %v1174 = vmul.f32 %v1138, %v1160
    %v1175 = vmul.f32 %v1139, %v1160
    %v1176 = vmul.f32 %v1140, %v1164
    %v1177 = vmul.f32 %v1141, %v1164
    %1178 = vset.pattern.permute.xlu0 13
    %1179 = vperm.xlu0 %1178, %v17
    %v1180 = vpop.permute.xlu0 %1179
    %1182 = vset.pattern.permute.xlu0 13
    %1183 = vperm.xlu0 %1182, %v18
    %v1184 = vpop.permute.xlu0 %1183
    %1186 = vset.pattern.permute.xlu0 13
    %1187 = vperm.xlu0 %1186, %v19
    %v1188 = vpop.permute.xlu0 %1187
    %1190 = vset.pattern.permute.xlu0 13
    %1191 = vperm.xlu0 %1190, %v20
    %v1192 = vpop.permute.xlu0 %1191
    %1194 = vset.pattern.permute.xlu0 13
    %1195 = vperm.xlu0 %1194, %v21
    %v1196 = vpop.permute.xlu0 %1195
    %1198 = vset.pattern.permute.xlu0 13
    %1199 = vperm.xlu0 %1198, %v22
    %v1200 = vpop.permute.xlu0 %1199
    %v1202 = vmul.f32 %v789, %v1180
    %v1203 = vmul.f32 %v790, %v1180
    %v1204 = vmul.f32 %v791, %v1184
    %v1205 = vmul.f32 %v792, %v1184
    %v1206 = vmul.f32 %v793, %v1188
    %v1207 = vmul.f32 %v794, %v1188
    %v1208 = vmul.f32 %v795, %v1192
    %v1209 = vmul.f32 %v796, %v1192
    %v1210 = vmul.f32 %v797, %v1196
    %v1211 = vmul.f32 %v798, %v1196
    %v1212 = vmul.f32 %v799, %v1200
    %v1213 = vmul.f32 %v800, %v1200
    %1214 = vrot.lane.b32.xlu0 %v789, 127
    %v1215 = vpop.permute.xlu0 %1214
    %1216 = vrot.lane.b32.xlu0 %v791, 127
    %v1217 = vpop.permute.xlu0 %1216
    %1218 = vrot.lane.b32.xlu0 %v793, 127
    %v1219 = vpop.permute.xlu0 %1218
    %1220 = vrot.lane.b32.xlu0 %v795, 127
    %v1221 = vpop.permute.xlu0 %1220
    %1222 = vrot.lane.b32.xlu0 %v797, 127
    %v1223 = vpop.permute.xlu0 %1222
    %1224 = vrot.lane.b32.xlu0 %v799, 127
    %v1225 = vpop.permute.xlu0 %1224
    %1226 = vrot.lane.b32.xlu0 %v790, 127
    %v1227 = vpop.permute.xlu0 %1226
    %1228 = vrot.lane.b32.xlu0 %v792, 127
    %v1229 = vpop.permute.xlu0 %1228
    %1230 = vrot.lane.b32.xlu0 %v794, 127
    %v1231 = vpop.permute.xlu0 %1230
    %1232 = vrot.lane.b32.xlu0 %v796, 127
    %v1233 = vpop.permute.xlu0 %1232
    %1234 = vrot.lane.b32.xlu0 %v798, 127
    %v1235 = vpop.permute.xlu0 %1234
    %1236 = vrot.lane.b32.xlu0 %v800, 127
    %v1237 = vpop.permute.xlu0 %1236
    %vm1238 = vcmp.lt.s32.totalorder %v802, 127
    %v1239 = vsel %vm1238, %v1215, %v1227
    %v1240 = vsel %vm1238, %v1217, %v1229
    %v1241 = vsel %vm1238, %v1219, %v1231
    %v1242 = vsel %vm1238, %v1221, %v1233
    %v1243 = vsel %vm1238, %v1223, %v1235
    %v1244 = vsel %vm1238, %v1225, %v1237
    %v1245 = vsel %vm1238, %v1227, %v1215
    %v1246 = vsel %vm1238, %v1229, %v1217
    %v1247 = vsel %vm1238, %v1231, %v1219
    %v1248 = vsel %vm1238, %v1233, %v1221
    %v1249 = vsel %vm1238, %v1235, %v1223
    %v1250 = vsel %vm1238, %v1237, %v1225
    %v1251 = vsel %vm812, 1, 0
    %v1252 = vsel %vm813, 1, 0
    %vm1253 = vcmp.eq.s32.totalorder %v1251, 1
    %vm1254 = vcmp.eq.s32.totalorder %v1252, 1
    %v1255 = vsel %vm1253, %v1239, 0.0
    %v1256 = vsel %vm1254, %v1245, 0.0
    %v1257 = vsel %vm1253, %v1240, 0.0
    %v1258 = vsel %vm1254, %v1246, 0.0
    %v1259 = vsel %vm1253, %v1241, 0.0
    %v1260 = vsel %vm1254, %v1247, 0.0
    %v1261 = vsel %vm1253, %v1242, 0.0
    %v1262 = vsel %vm1254, %v1248, 0.0
    %v1263 = vsel %vm1253, %v1243, 0.0
    %v1264 = vsel %vm1254, %v1249, 0.0
    %v1265 = vsel %vm1253, %v1244, 0.0
    %v1266 = vsel %vm1254, %v1250, 0.0
    %1267 = vset.pattern.permute.xlu0 14
    %1268 = vperm.xlu0 %1267, %v17
    %v1269 = vpop.permute.xlu0 %1268
    %1271 = vset.pattern.permute.xlu0 14
    %1272 = vperm.xlu0 %1271, %v18
    %v1273 = vpop.permute.xlu0 %1272
    %1275 = vset.pattern.permute.xlu0 14
    %1276 = vperm.xlu0 %1275, %v19
    %v1277 = vpop.permute.xlu0 %1276
    %1279 = vset.pattern.permute.xlu0 14
    %1280 = vperm.xlu0 %1279, %v20
    %v1281 = vpop.permute.xlu0 %1280
    %1283 = vset.pattern.permute.xlu0 14
    %1284 = vperm.xlu0 %1283, %v21
    %v1285 = vpop.permute.xlu0 %1284
    %1287 = vset.pattern.permute.xlu0 14
    %1288 = vperm.xlu0 %1287, %v22
    %v1289 = vpop.permute.xlu0 %1288
    %v1291 = vmul.f32 %v1255, %v1269
    %v1292 = vmul.f32 %v1256, %v1269
    %v1293 = vmul.f32 %v1257, %v1273
    %v1294 = vmul.f32 %v1258, %v1273
    %v1295 = vmul.f32 %v1259, %v1277
    %v1296 = vmul.f32 %v1260, %v1277
    %v1297 = vmul.f32 %v1261, %v1281
    %v1298 = vmul.f32 %v1262, %v1281
    %v1299 = vmul.f32 %v1263, %v1285
    %v1300 = vmul.f32 %v1264, %v1285
    %v1301 = vmul.f32 %v1265, %v1289
    %v1302 = vmul.f32 %v1266, %v1289
    %1303 = vrot.lane.b32.xlu0 %v789, 113
    %v1304 = vpop.permute.xlu0 %1303
    %1305 = vrot.lane.b32.xlu0 %v791, 113
    %v1306 = vpop.permute.xlu0 %1305
    %1307 = vrot.lane.b32.xlu0 %v793, 113
    %v1308 = vpop.permute.xlu0 %1307
    %1309 = vrot.lane.b32.xlu0 %v795, 113
    %v1310 = vpop.permute.xlu0 %1309
    %1311 = vrot.lane.b32.xlu0 %v797, 113
    %v1312 = vpop.permute.xlu0 %1311
    %1313 = vrot.lane.b32.xlu0 %v799, 113
    %v1314 = vpop.permute.xlu0 %1313
    %1315 = vrot.lane.b32.xlu0 %v790, 113
    %v1316 = vpop.permute.xlu0 %1315
    %1317 = vrot.lane.b32.xlu0 %v792, 113
    %v1318 = vpop.permute.xlu0 %1317
    %1319 = vrot.lane.b32.xlu0 %v794, 113
    %v1320 = vpop.permute.xlu0 %1319
    %1321 = vrot.lane.b32.xlu0 %v796, 113
    %v1322 = vpop.permute.xlu0 %1321
    %1323 = vrot.lane.b32.xlu0 %v798, 113
    %v1324 = vpop.permute.xlu0 %1323
    %1325 = vrot.lane.b32.xlu0 %v800, 113
    %v1326 = vpop.permute.xlu0 %1325
    %vm1327 = vcmp.lt.s32.totalorder %v802, 113
    %v1328 = vsel %vm1327, %v1304, %v1316
    %v1329 = vsel %vm1327, %v1306, %v1318
    %v1330 = vsel %vm1327, %v1308, %v1320
    %v1331 = vsel %vm1327, %v1310, %v1322
    %v1332 = vsel %vm1327, %v1312, %v1324
    %v1333 = vsel %vm1327, %v1314, %v1326
    %v1334 = vsel %vm1327, %v1316, %v1304
    %v1335 = vsel %vm1327, %v1318, %v1306
    %v1336 = vsel %vm1327, %v1320, %v1308
    %v1337 = vsel %vm1327, %v1322, %v1310
    %v1338 = vsel %vm1327, %v1324, %v1312
    %v1339 = vsel %vm1327, %v1326, %v1314
    %v1340 = vsel %vm818, 1, 0
    %v1341 = vsel %vm819, 1, 0
    %vm1342 = vcmp.eq.s32.totalorder %v1340, 1
    %vm1343 = vcmp.eq.s32.totalorder %v1341, 1
    %v1344 = vsel %vm1342, %v1328, 0.0
    %v1345 = vsel %vm1343, %v1334, 0.0
    %v1346 = vsel %vm1342, %v1329, 0.0
    %v1347 = vsel %vm1343, %v1335, 0.0
    %v1348 = vsel %vm1342, %v1330, 0.0
    %v1349 = vsel %vm1343, %v1336, 0.0
    %v1350 = vsel %vm1342, %v1331, 0.0
    %v1351 = vsel %vm1343, %v1337, 0.0
    %v1352 = vsel %vm1342, %v1332, 0.0
    %v1353 = vsel %vm1343, %v1338, 0.0
    %v1354 = vsel %vm1342, %v1333, 0.0
    %v1355 = vsel %vm1343, %v1339, 0.0
    %1356 = vset.pattern.permute.xlu0 15
    %1357 = vperm.xlu0 %1356, %v17
    %v1358 = vpop.permute.xlu0 %1357
    %1360 = vset.pattern.permute.xlu0 15
    %1361 = vperm.xlu0 %1360, %v18
    %v1362 = vpop.permute.xlu0 %1361
    %1364 = vset.pattern.permute.xlu0 15
    %1365 = vperm.xlu0 %1364, %v19
    %v1366 = vpop.permute.xlu0 %1365
    %1368 = vset.pattern.permute.xlu0 15
    %1369 = vperm.xlu0 %1368, %v20
    %v1370 = vpop.permute.xlu0 %1369
    %1372 = vset.pattern.permute.xlu0 15
    %1373 = vperm.xlu0 %1372, %v21
    %v1374 = vpop.permute.xlu0 %1373
    %1376 = vset.pattern.permute.xlu0 15
    %1377 = vperm.xlu0 %1376, %v22
    %v1378 = vpop.permute.xlu0 %1377
    %v1380 = vmul.f32 %v1344, %v1358
    %v1381 = vmul.f32 %v1345, %v1358
    %v1382 = vmul.f32 %v1346, %v1362
    %v1383 = vmul.f32 %v1347, %v1362
    %v1384 = vmul.f32 %v1348, %v1366
    %v1385 = vmul.f32 %v1349, %v1366
    %v1386 = vmul.f32 %v1350, %v1370
    %v1387 = vmul.f32 %v1351, %v1370
    %v1388 = vmul.f32 %v1352, %v1374
    %v1389 = vmul.f32 %v1353, %v1374
    %v1390 = vmul.f32 %v1354, %v1378
    %v1391 = vmul.f32 %v1355, %v1378
    %1392 = vrot.lane.b32.xlu0 %v789, 112
    %v1393 = vpop.permute.xlu0 %1392
    %1394 = vrot.lane.b32.xlu0 %v791, 112
    %v1395 = vpop.permute.xlu0 %1394
    %1396 = vrot.lane.b32.xlu0 %v793, 112
    %v1397 = vpop.permute.xlu0 %1396
    %1398 = vrot.lane.b32.xlu0 %v795, 112
    %v1399 = vpop.permute.xlu0 %1398
    %1400 = vrot.lane.b32.xlu0 %v797, 112
    %v1401 = vpop.permute.xlu0 %1400
    %1402 = vrot.lane.b32.xlu0 %v799, 112
    %v1403 = vpop.permute.xlu0 %1402
    %1404 = vrot.lane.b32.xlu0 %v790, 112
    %v1405 = vpop.permute.xlu0 %1404
    %1406 = vrot.lane.b32.xlu0 %v792, 112
    %v1407 = vpop.permute.xlu0 %1406
    %1408 = vrot.lane.b32.xlu0 %v794, 112
    %v1409 = vpop.permute.xlu0 %1408
    %1410 = vrot.lane.b32.xlu0 %v796, 112
    %v1411 = vpop.permute.xlu0 %1410
    %1412 = vrot.lane.b32.xlu0 %v798, 112
    %v1413 = vpop.permute.xlu0 %1412
    %1414 = vrot.lane.b32.xlu0 %v800, 112
    %v1415 = vpop.permute.xlu0 %1414
    %vm1416 = vcmp.lt.s32.totalorder %v802, 112
    %v1417 = vsel %vm1416, %v1393, %v1405
    %v1418 = vsel %vm1416, %v1395, %v1407
    %v1419 = vsel %vm1416, %v1397, %v1409
    %v1420 = vsel %vm1416, %v1399, %v1411
    %v1421 = vsel %vm1416, %v1401, %v1413
    %v1422 = vsel %vm1416, %v1403, %v1415
    %v1423 = vsel %vm1416, %v1405, %v1393
    %v1424 = vsel %vm1416, %v1407, %v1395
    %v1425 = vsel %vm1416, %v1409, %v1397
    %v1426 = vsel %vm1416, %v1411, %v1399
    %v1427 = vsel %vm1416, %v1413, %v1401
    %v1428 = vsel %vm1416, %v1415, %v1403
    %v1429 = vsel %vm808, 1, 0
    %v1430 = vsel %vm809, 1, 0
    %vm1431 = vcmp.eq.s32.totalorder %v1429, 1
    %vm1432 = vcmp.eq.s32.totalorder %v1430, 1
    %v1433 = vsel %vm1431, %v1417, 0.0
    %v1434 = vsel %vm1432, %v1423, 0.0
    %v1435 = vsel %vm1431, %v1418, 0.0
    %v1436 = vsel %vm1432, %v1424, 0.0
    %v1437 = vsel %vm1431, %v1419, 0.0
    %v1438 = vsel %vm1432, %v1425, 0.0
    %v1439 = vsel %vm1431, %v1420, 0.0
    %v1440 = vsel %vm1432, %v1426, 0.0
    %v1441 = vsel %vm1431, %v1421, 0.0
    %v1442 = vsel %vm1432, %v1427, 0.0
    %v1443 = vsel %vm1431, %v1422, 0.0
    %v1444 = vsel %vm1432, %v1428, 0.0
    %1445 = vset.pattern.permute.xlu0 16
    %1446 = vperm.xlu0 %1445, %v17
    %v1447 = vpop.permute.xlu0 %1446
    %1449 = vset.pattern.permute.xlu0 16
    %1450 = vperm.xlu0 %1449, %v18
    %v1451 = vpop.permute.xlu0 %1450
    %1453 = vset.pattern.permute.xlu0 16
    %1454 = vperm.xlu0 %1453, %v19
    %v1455 = vpop.permute.xlu0 %1454
    %1457 = vset.pattern.permute.xlu0 16
    %1458 = vperm.xlu0 %1457, %v20
    %v1459 = vpop.permute.xlu0 %1458
    %1461 = vset.pattern.permute.xlu0 16
    %1462 = vperm.xlu0 %1461, %v21
    %v1463 = vpop.permute.xlu0 %1462
    %1465 = vset.pattern.permute.xlu0 16
    %1466 = vperm.xlu0 %1465, %v22
    %v1467 = vpop.permute.xlu0 %1466
    %v1469 = vmul.f32 %v1433, %v1447
    %v1470 = vmul.f32 %v1434, %v1447
    %v1471 = vmul.f32 %v1435, %v1451
    %v1472 = vmul.f32 %v1436, %v1451
    %v1473 = vmul.f32 %v1437, %v1455
    %v1474 = vmul.f32 %v1438, %v1455
    %v1475 = vmul.f32 %v1439, %v1459
    %v1476 = vmul.f32 %v1440, %v1459
    %v1477 = vmul.f32 %v1441, %v1463
    %v1478 = vmul.f32 %v1442, %v1463
    %v1479 = vmul.f32 %v1443, %v1467
    %v1480 = vmul.f32 %v1444, %v1467
    %1481 = vrot.lane.b32.xlu0 %v789, 111
    %v1482 = vpop.permute.xlu0 %1481
    %1483 = vrot.lane.b32.xlu0 %v791, 111
    %v1484 = vpop.permute.xlu0 %1483
    %1485 = vrot.lane.b32.xlu0 %v793, 111
    %v1486 = vpop.permute.xlu0 %1485
    %1487 = vrot.lane.b32.xlu0 %v795, 111
    %v1488 = vpop.permute.xlu0 %1487
    %1489 = vrot.lane.b32.xlu0 %v797, 111
    %v1490 = vpop.permute.xlu0 %1489
    %1491 = vrot.lane.b32.xlu0 %v799, 111
    %v1492 = vpop.permute.xlu0 %1491
    %1493 = vrot.lane.b32.xlu0 %v790, 111
    %v1494 = vpop.permute.xlu0 %1493
    %1495 = vrot.lane.b32.xlu0 %v792, 111
    %v1496 = vpop.permute.xlu0 %1495
    %1497 = vrot.lane.b32.xlu0 %v794, 111
    %v1498 = vpop.permute.xlu0 %1497
    %1499 = vrot.lane.b32.xlu0 %v796, 111
    %v1500 = vpop.permute.xlu0 %1499
    %1501 = vrot.lane.b32.xlu0 %v798, 111
    %v1502 = vpop.permute.xlu0 %1501
    %1503 = vrot.lane.b32.xlu0 %v800, 111
    %v1504 = vpop.permute.xlu0 %1503
    %vm1505 = vcmp.lt.s32.totalorder %v802, 111
    %v1506 = vsel %vm1505, %v1482, %v1494
    %v1507 = vsel %vm1505, %v1484, %v1496
    %v1508 = vsel %vm1505, %v1486, %v1498
    %v1509 = vsel %vm1505, %v1488, %v1500
    %v1510 = vsel %vm1505, %v1490, %v1502
    %v1511 = vsel %vm1505, %v1492, %v1504
    %v1512 = vsel %vm1505, %v1494, %v1482
    %v1513 = vsel %vm1505, %v1496, %v1484
    %v1514 = vsel %vm1505, %v1498, %v1486
    %v1515 = vsel %vm1505, %v1500, %v1488
    %v1516 = vsel %vm1505, %v1502, %v1490
    %v1517 = vsel %vm1505, %v1504, %v1492
    %v1518 = vsel %vm820, 1, 0
    %v1519 = vsel %vm821, 1, 0
    %vm1520 = vcmp.eq.s32.totalorder %v1518, 1
    %vm1521 = vcmp.eq.s32.totalorder %v1519, 1
    %v1522 = vsel %vm1520, %v1506, 0.0
    %v1523 = vsel %vm1521, %v1512, 0.0
    %v1524 = vsel %vm1520, %v1507, 0.0
    %v1525 = vsel %vm1521, %v1513, 0.0
    %v1526 = vsel %vm1520, %v1508, 0.0
    %v1527 = vsel %vm1521, %v1514, 0.0
    %v1528 = vsel %vm1520, %v1509, 0.0
    %v1529 = vsel %vm1521, %v1515, 0.0
    %v1530 = vsel %vm1520, %v1510, 0.0
    %v1531 = vsel %vm1521, %v1516, 0.0
    %v1532 = vsel %vm1520, %v1511, 0.0
    %v1533 = vsel %vm1521, %v1517, 0.0
    %1534 = vset.pattern.permute.xlu0 17
    %1535 = vperm.xlu0 %1534, %v17
    %v1536 = vpop.permute.xlu0 %1535
    %1538 = vset.pattern.permute.xlu0 17
    %1539 = vperm.xlu0 %1538, %v18
    %v1540 = vpop.permute.xlu0 %1539
    %1542 = vset.pattern.permute.xlu0 17
    %1543 = vperm.xlu0 %1542, %v19
    %v1544 = vpop.permute.xlu0 %1543
    %1546 = vset.pattern.permute.xlu0 17
    %1547 = vperm.xlu0 %1546, %v20
    %v1548 = vpop.permute.xlu0 %1547
    %1550 = vset.pattern.permute.xlu0 17
    %1551 = vperm.xlu0 %1550, %v21
    %v1552 = vpop.permute.xlu0 %1551
    %1554 = vset.pattern.permute.xlu0 17
    %1555 = vperm.xlu0 %1554, %v22
    %v1556 = vpop.permute.xlu0 %1555
    %v1558 = vmul.f32 %v1522, %v1536
    %v1559 = vmul.f32 %v1523, %v1536
    %v1560 = vmul.f32 %v1524, %v1540
    %v1561 = vmul.f32 %v1525, %v1540
    %v1562 = vmul.f32 %v1526, %v1544
    %v1563 = vmul.f32 %v1527, %v1544
    %v1564 = vmul.f32 %v1528, %v1548
    %v1565 = vmul.f32 %v1529, %v1548
    %v1566 = vmul.f32 %v1530, %v1552
    %v1567 = vmul.f32 %v1531, %v1552
    %v1568 = vmul.f32 %v1532, %v1556
    %v1569 = vmul.f32 %v1533, %v1556
    %v1570 = vadd.f32 %v899, %v988
    %v1571 = vadd.f32 %v900, %v989
    %v1572 = vadd.f32 %v901, %v990
    %v1573 = vadd.f32 %v902, %v991
    %v1574 = vadd.f32 %v903, %v992
    %v1575 = vadd.f32 %v904, %v993
    %v1576 = vadd.f32 %v905, %v994
    %v1577 = vadd.f32 %v906, %v995
    %v1578 = vadd.f32 %v907, %v996
    %v1579 = vadd.f32 %v908, %v997
    %v1580 = vadd.f32 %v909, %v998
    %v1581 = vadd.f32 %v910, %v999
    %v1582 = vadd.f32 %v1077, %v1166
    %v1583 = vadd.f32 %v1078, %v1167
    %v1584 = vadd.f32 %v1079, %v1168
    %v1585 = vadd.f32 %v1080, %v1169
    %v1586 = vadd.f32 %v1081, %v1170
    %v1587 = vadd.f32 %v1082, %v1171
    %v1588 = vadd.f32 %v1083, %v1172
    %v1589 = vadd.f32 %v1084, %v1173
    %v1590 = vadd.f32 %v1085, %v1174
    %v1591 = vadd.f32 %v1086, %v1175
    %v1592 = vadd.f32 %v1087, %v1176
    %v1593 = vadd.f32 %v1088, %v1177
    %v1594 = vadd.f32 %v1570, %v1582
    %v1595 = vadd.f32 %v1571, %v1583
    %v1596 = vadd.f32 %v1572, %v1584
    %v1597 = vadd.f32 %v1573, %v1585
    %v1598 = vadd.f32 %v1574, %v1586
    %v1599 = vadd.f32 %v1575, %v1587
    %v1600 = vadd.f32 %v1576, %v1588
    %v1601 = vadd.f32 %v1577, %v1589
    %v1602 = vadd.f32 %v1578, %v1590
    %v1603 = vadd.f32 %v1579, %v1591
    %v1604 = vadd.f32 %v1580, %v1592
    %v1605 = vadd.f32 %v1581, %v1593
    %v1606 = vadd.f32 %v1202, %v1291
    %v1607 = vadd.f32 %v1203, %v1292
    %v1608 = vadd.f32 %v1204, %v1293
    %v1609 = vadd.f32 %v1205, %v1294
    %v1610 = vadd.f32 %v1206, %v1295
    %v1611 = vadd.f32 %v1207, %v1296
    %v1612 = vadd.f32 %v1208, %v1297
    %v1613 = vadd.f32 %v1209, %v1298
    %v1614 = vadd.f32 %v1210, %v1299
    %v1615 = vadd.f32 %v1211, %v1300
    %v1616 = vadd.f32 %v1212, %v1301
    %v1617 = vadd.f32 %v1213, %v1302
    %v1618 = vadd.f32 %v1380, %v1469
    %v1619 = vadd.f32 %v1381, %v1470
    %v1620 = vadd.f32 %v1382, %v1471
    %v1621 = vadd.f32 %v1383, %v1472
    %v1622 = vadd.f32 %v1384, %v1473
    %v1623 = vadd.f32 %v1385, %v1474
    %v1624 = vadd.f32 %v1386, %v1475
    %v1625 = vadd.f32 %v1387, %v1476
    %v1626 = vadd.f32 %v1388, %v1477
    %v1627 = vadd.f32 %v1389, %v1478
    %v1628 = vadd.f32 %v1390, %v1479
    %v1629 = vadd.f32 %v1391, %v1480
    %v1630 = vadd.f32 %v1606, %v1618
    %v1631 = vadd.f32 %v1607, %v1619
    %v1632 = vadd.f32 %v1608, %v1620
    %v1633 = vadd.f32 %v1609, %v1621
    %v1634 = vadd.f32 %v1610, %v1622
    %v1635 = vadd.f32 %v1611, %v1623
    %v1636 = vadd.f32 %v1612, %v1624
    %v1637 = vadd.f32 %v1613, %v1625
    %v1638 = vadd.f32 %v1614, %v1626
    %v1639 = vadd.f32 %v1615, %v1627
    %v1640 = vadd.f32 %v1616, %v1628
    %v1641 = vadd.f32 %v1617, %v1629
    %v1642 = vadd.f32 %v1594, %v1630
    %v1643 = vadd.f32 %v1595, %v1631
    %v1644 = vadd.f32 %v1596, %v1632
    %v1645 = vadd.f32 %v1597, %v1633
    %v1646 = vadd.f32 %v1598, %v1634
    %v1647 = vadd.f32 %v1599, %v1635
    %v1648 = vadd.f32 %v1600, %v1636
    %v1649 = vadd.f32 %v1601, %v1637
    %v1650 = vadd.f32 %v1602, %v1638
    %v1651 = vadd.f32 %v1603, %v1639
    %v1652 = vadd.f32 %v1604, %v1640
    %v1653 = vadd.f32 %v1605, %v1641
    %v1654 = vadd.f32 %v1642, %v1558
    %v1655 = vadd.f32 %v1643, %v1559
    %v1656 = vadd.f32 %v1644, %v1560
    %v1657 = vadd.f32 %v1645, %v1561
    %v1658 = vadd.f32 %v1646, %v1562
    %v1659 = vadd.f32 %v1647, %v1563
    %v1660 = vadd.f32 %v1648, %v1564
    %v1661 = vadd.f32 %v1649, %v1565
    %v1662 = vadd.f32 %v1650, %v1566
    %v1663 = vadd.f32 %v1651, %v1567
    %v1664 = vadd.f32 %v1652, %v1568
    %v1665 = vadd.f32 %v1653, %v1569
    %1666 = vset.pattern.permute.xlu0 18
    %1667 = vperm.xlu0 %1666, %v17
    %v1668 = vpop.permute.xlu0 %1667
    %1670 = vset.pattern.permute.xlu0 18
    %1671 = vperm.xlu0 %1670, %v18
    %v1672 = vpop.permute.xlu0 %1671
    %1674 = vset.pattern.permute.xlu0 18
    %1675 = vperm.xlu0 %1674, %v19
    %v1676 = vpop.permute.xlu0 %1675
    %1678 = vset.pattern.permute.xlu0 18
    %1679 = vperm.xlu0 %1678, %v20
    %v1680 = vpop.permute.xlu0 %1679
    %1682 = vset.pattern.permute.xlu0 18
    %1683 = vperm.xlu0 %1682, %v21
    %v1684 = vpop.permute.xlu0 %1683
    %1686 = vset.pattern.permute.xlu0 18
    %1687 = vperm.xlu0 %1686, %v22
    %v1688 = vpop.permute.xlu0 %1687
    %v1690 = vadd.f32 %v1654, %v1668
    %v1691 = vadd.f32 %v1655, %v1668
    %v1692 = vadd.f32 %v1656, %v1672
    %v1693 = vadd.f32 %v1657, %v1672
    %v1694 = vadd.f32 %v1658, %v1676
    %v1695 = vadd.f32 %v1659, %v1676
    %v1696 = vadd.f32 %v1660, %v1680
    %v1697 = vadd.f32 %v1661, %v1680
    %v1698 = vadd.f32 %v1662, %v1684
    %v1699 = vadd.f32 %v1663, %v1684
    %v1700 = vadd.f32 %v1664, %v1688
    %v1701 = vadd.f32 %v1665, %v1688
    %v1702 = vmax.f32 %v1690, 0.0
    %v1703 = vmax.f32 %v1691, 0.0
    %v1704 = vmax.f32 %v1692, 0.0
    %v1705 = vmax.f32 %v1693, 0.0
    %v1706 = vmax.f32 %v1694, 0.0
    %v1707 = vmax.f32 %v1695, 0.0
    %v1708 = vmax.f32 %v1696, 0.0
    %v1709 = vmax.f32 %v1697, 0.0
    %v1710 = vmax.f32 %v1698, 0.0
    %v1711 = vmax.f32 %v1699, 0.0
    %v1712 = vmax.f32 %v1700, 0.0
    %v1713 = vmax.f32 %v1701, 0.0
    %v1714 = vmin.f32 %v1702, 6.0
    %v1715 = vmin.f32 %v1703, 6.0
    %v1716 = vmin.f32 %v1704, 6.0
    %v1717 = vmin.f32 %v1705, 6.0
    %v1718 = vmin.f32 %v1706, 6.0
    %v1719 = vmin.f32 %v1707, 6.0
    %v1720 = vmin.f32 %v1708, 6.0
    %v1721 = vmin.f32 %v1709, 6.0
    %v1722 = vmin.f32 %v1710, 6.0
    %v1723 = vmin.f32 %v1711, 6.0
    %v1724 = vmin.f32 %v1712, 6.0
    %v1725 = vmin.f32 %v1713, 6.0
    %1727 = vset.pattern.permute.xlu0 48
    %1728 = vperm.xlu0 %1727, %v23
    %v1729 = vpop.permute.xlu0 %1728
    %vm1731 = vcmask 392192
    %v1732 = vsel %vm1731, %v23, 0
    %v1734 = vand.u32 %v1715, 4294901760
    %1735 = vmatprep.subr.mxu0 %v1734
    %v1736 = vand.u32 %v1714, 4294901760
    %1737 = vmatpush1.msra.mxu0 %v1736
    %v1738 = vand.u32 %v1717, 4294901760
    %1739 = vmatprep.subr.mxu0 %v1738
    %v1740 = vand.u32 %v1716, 4294901760
    %1741 = vmatpush1.msra.mxu0 %v1740
    %v1742 = vand.u32 %v1719, 4294901760
    %1743 = vmatprep.subr.mxu0 %v1742
    %v1744 = vand.u32 %v1718, 4294901760
    %1745 = vmatpush1.msra.mxu0 %v1744
    %v1746 = vand.u32 %v1721, 4294901760
    %1747 = vmatprep.subr.mxu0 %v1746
    %v1748 = vand.u32 %v1720, 4294901760
    %1749 = vmatpush1.msra.mxu0 %v1748
    %v1750 = vand.u32 %v1723, 4294901760
    %1751 = vmatprep.subr.mxu0 %v1750
    %v1752 = vand.u32 %v1722, 4294901760
    %1753 = vmatpush1.msra.mxu0 %v1752
    %v1754 = vand.u32 %v1725, 4294901760
    %1755 = vmatprep.subr.mxu0 %v1754
    %v1756 = vand.u32 %v1724, 4294901760
    %1757 = vmatpush1.msra.mxu0 %v1756
    %1758 = vmatprep.subr.mxu0 0.0
    %1759 = vmatpush1.msra.mxu0 0.0
    %1760 = vmatprep.subr.mxu0 0.0
    %1761 = vmatpush1.msra.mxu0 0.0
    %1762 = vmatprep.subr.mxu0 0.0
    %1763 = vmatpush1.msra.mxu0 0.0
    %1764 = vmatprep.subr.mxu0 0.0
    %1765 = vmatpush1.msra.mxu0 0.0
    %1766 = vmatprep.subr.mxu0 0.0
    %1767 = vmatpush1.msra.mxu0 0.0
    %1768 = vmatprep.subr.mxu0 0.0
    %1769 = vmatpush1.msra.mxu0 0.0
    %1770 = vmatprep.subr.mxu0 0.0
    %1771 = vmatpush1.msra.mxu0 0.0
    %1772 = vmatprep.subr.mxu0 0.0
    %1773 = vmatpush1.msra.mxu0 0.0
    %1774 = vmatprep.subr.mxu0 0.0
    %1775 = vmatpush1.msra.mxu0 0.0
    %1776 = vmatprep.subr.mxu0 0.0
    %1777 = vmatpush1.msra.mxu0 0.0
    %1778 = vmatprep.subr.mxu0 0.0
    %1779 = vmatpush1.msra.mxu0 0.0
    %1780 = vmatprep.subr.mxu0 0.0
    %1781 = vmatpush1.msra.mxu0 0.0
    %1782 = vmatprep.subr.mxu0 0.0
    %1783 = vmatpush1.msra.mxu0 0.0
    %1784 = vmatprep.subr.mxu0 0.0
    %1785 = vmatpush1.msra.mxu0 0.0
    %1786 = vmatprep.subr.mxu0 0.0
    %1787 = vmatpush1.msra.mxu0 0.0
    %1788 = vmatprep.subr.mxu0 0.0
    %1789 = vmatpush1.msra.mxu0 0.0
    %1790 = vmatprep.subr.mxu0 0.0
    %1791 = vmatpush1.msra.mxu0 0.0
    %1792 = vmatprep.subr.mxu0 0.0
    %1793 = vmatpush1.msra.mxu0 0.0
    %1794 = vmatprep.subr.mxu0 0.0
    %1795 = vmatpush1.msra.mxu0 0.0
    %1796 = vmatprep.subr.mxu0 0.0
    %1797 = vmatpush1.msra.mxu0 0.0
    %1798 = vmatprep.subr.mxu0 0.0
    %1799 = vmatpush1.msra.mxu0 0.0
    %1800 = vmatprep.subr.mxu0 0.0
    %1801 = vmatpush1.msra.mxu0 0.0
    %1802 = vmatprep.subr.mxu0 0.0
    %1803 = vmatpush1.msra.mxu0 0.0
    %1804 = vmatprep.subr.mxu0 0.0
    %1805 = vmatpush1.msra.mxu0 0.0
    %1806 = vmatprep.subr.mxu0 0.0
    %1807 = vmatpush1.msra.mxu0 0.0
    %1808 = vmatprep.subr.mxu0 0.0
    %1809 = vmatpush1.msra.mxu0 0.0
    %1810 = vmatprep.mubr.f32.mxu0 0.0
    %v1811 = vand.u32 %v1732, 4294901760
    %v1812 = vsub.f32 %v1732, %v1811
    %v1813 = vand.u32 %v1812, 4294901760
    %v1814 = vsub.f32 %v1812, %v1813
    %v1815 = vand.u32 %v1814, 4294901760
    %1816 = vmatmul.mubr.f32.gmra.mrb[0].mxu0 %v1815
    %v1817 = vpop.f32.mrb[0].mxu0
    %v1818 = vadd.f32 %v1729, %v1817
    %v1819 = vpop.f32.mrb[0].mxu0
    %v1820 = vadd.f32 %v1729, %v1819
    %1821 = vdwg.mxu0
    %v1822 = vand.u32 %v1715, 4294901760
    %v1823 = vsub.f32 %v1715, %v1822
    %v1824 = vand.u32 %v1823, 4294901760
    %v1825 = vsub.f32 %v1823, %v1824
    %v1826 = vand.u32 %v1825, 4294901760
    %1827 = vmatprep.subr.mxu0 %v1826
    %v1828 = vand.u32 %v1714, 4294901760
    %v1829 = vsub.f32 %v1714, %v1828
    %v1830 = vand.u32 %v1829, 4294901760
    %v1831 = vsub.f32 %v1829, %v1830
    %v1832 = vand.u32 %v1831, 4294901760
    %1833 = vmatpush1.msra.mxu0 %v1832
    %v1834 = vand.u32 %v1717, 4294901760
    %v1835 = vsub.f32 %v1717, %v1834
    %v1836 = vand.u32 %v1835, 4294901760
    %v1837 = vsub.f32 %v1835, %v1836
    %v1838 = vand.u32 %v1837, 4294901760
    %1839 = vmatprep.subr.mxu0 %v1838
    %v1840 = vand.u32 %v1716, 4294901760
    %v1841 = vsub.f32 %v1716, %v1840
    %v1842 = vand.u32 %v1841, 4294901760
    %v1843 = vsub.f32 %v1841, %v1842
    %v1844 = vand.u32 %v1843, 4294901760
    %1845 = vmatpush1.msra.mxu0 %v1844
    %v1846 = vand.u32 %v1719, 4294901760
    %v1847 = vsub.f32 %v1719, %v1846
    %v1848 = vand.u32 %v1847, 4294901760
    %v1849 = vsub.f32 %v1847, %v1848
    %v1850 = vand.u32 %v1849, 4294901760
    %1851 = vmatprep.subr.mxu0 %v1850
    %v1852 = vand.u32 %v1718, 4294901760
    %v1853 = vsub.f32 %v1718, %v1852
    %v1854 = vand.u32 %v1853, 4294901760
    %v1855 = vsub.f32 %v1853, %v1854
    %v1856 = vand.u32 %v1855, 4294901760
    %1857 = vmatpush1.msra.mxu0 %v1856
    %v1858 = vand.u32 %v1721, 4294901760
    %v1859 = vsub.f32 %v1721, %v1858
    %v1860 = vand.u32 %v1859, 4294901760
    %v1861 = vsub.f32 %v1859, %v1860
    %v1862 = vand.u32 %v1861, 4294901760
    %1863 = vmatprep.subr.mxu0 %v1862
    %v1864 = vand.u32 %v1720, 4294901760
    %v1865 = vsub.f32 %v1720, %v1864
    %v1866 = vand.u32 %v1865, 4294901760
    %v1867 = vsub.f32 %v1865, %v1866
    %v1868 = vand.u32 %v1867, 4294901760
    %1869 = vmatpush1.msra.mxu0 %v1868
    %v1870 = vand.u32 %v1723, 4294901760
    %v1871 = vsub.f32 %v1723, %v1870
    %v1872 = vand.u32 %v1871, 4294901760
    %v1873 = vsub.f32 %v1871, %v1872
    %v1874 = vand.u32 %v1873, 4294901760
    %1875 = vmatprep.subr.mxu0 %v1874
    %v1876 = vand.u32 %v1722, 4294901760
    %v1877 = vsub.f32 %v1722, %v1876
    %v1878 = vand.u32 %v1877, 4294901760
    %v1879 = vsub.f32 %v1877, %v1878
    %v1880 = vand.u32 %v1879, 4294901760
    %1881 = vmatpush1.msra.mxu0 %v1880
    %v1882 = vand.u32 %v1725, 4294901760
    %v1883 = vsub.f32 %v1725, %v1882
    %v1884 = vand.u32 %v1883, 4294901760
    %v1885 = vsub.f32 %v1883, %v1884
    %v1886 = vand.u32 %v1885, 4294901760
    %1887 = vmatprep.subr.mxu0 %v1886
    %v1888 = vand.u32 %v1724, 4294901760
    %v1889 = vsub.f32 %v1724, %v1888
    %v1890 = vand.u32 %v1889, 4294901760
    %v1891 = vsub.f32 %v1889, %v1890
    %v1892 = vand.u32 %v1891, 4294901760
    %1893 = vmatpush1.msra.mxu0 %v1892
    %1894 = vmatprep.subr.mxu0 0.0
    %1895 = vmatpush1.msra.mxu0 0.0
    %1896 = vmatprep.subr.mxu0 0.0
    %1897 = vmatpush1.msra.mxu0 0.0
    %1898 = vmatprep.subr.mxu0 0.0
    %1899 = vmatpush1.msra.mxu0 0.0
    %1900 = vmatprep.subr.mxu0 0.0
    %1901 = vmatpush1.msra.mxu0 0.0
    %1902 = vmatprep.subr.mxu0 0.0
    %1903 = vmatpush1.msra.mxu0 0.0
    %1904 = vmatprep.subr.mxu0 0.0
    %1905 = vmatpush1.msra.mxu0 0.0
    %1906 = vmatprep.subr.mxu0 0.0
    %1907 = vmatpush1.msra.mxu0 0.0
    %1908 = vmatprep.subr.mxu0 0.0
    %1909 = vmatpush1.msra.mxu0 0.0
    %1910 = vmatprep.subr.mxu0 0.0
    %1911 = vmatpush1.msra.mxu0 0.0
    %1912 = vmatprep.subr.mxu0 0.0
    %1913 = vmatpush1.msra.mxu0 0.0
    %1914 = vmatprep.subr.mxu0 0.0
    %1915 = vmatpush1.msra.mxu0 0.0
    %1916 = vmatprep.subr.mxu0 0.0
    %1917 = vmatpush1.msra.mxu0 0.0
    %1918 = vmatprep.subr.mxu0 0.0
    %1919 = vmatpush1.msra.mxu0 0.0
    %1920 = vmatprep.subr.mxu0 0.0
    %1921 = vmatpush1.msra.mxu0 0.0
    %1922 = vmatprep.subr.mxu0 0.0
    %1923 = vmatpush1.msra.mxu0 0.0
    %1924 = vmatprep.subr.mxu0 0.0
    %1925 = vmatpush1.msra.mxu0 0.0
    %1926 = vmatprep.subr.mxu0 0.0
    %1927 = vmatpush1.msra.mxu0 0.0
    %1928 = vmatprep.subr.mxu0 0.0
    %1929 = vmatpush1.msra.mxu0 0.0
    %1930 = vmatprep.subr.mxu0 0.0
    %1931 = vmatpush1.msra.mxu0 0.0
    %1932 = vmatprep.subr.mxu0 0.0
    %1933 = vmatpush1.msra.mxu0 0.0
    %1934 = vmatprep.subr.mxu0 0.0
    %1935 = vmatpush1.msra.mxu0 0.0
    %1936 = vmatprep.subr.mxu0 0.0
    %1937 = vmatpush1.msra.mxu0 0.0
    %1938 = vmatprep.subr.mxu0 0.0
    %1939 = vmatpush1.msra.mxu0 0.0
    %1940 = vmatprep.subr.mxu0 0.0
    %1941 = vmatpush1.msra.mxu0 0.0
    %1942 = vmatprep.subr.mxu0 0.0
    %1943 = vmatpush1.msra.mxu0 0.0
    %1944 = vmatprep.subr.mxu0 0.0
    %1945 = vmatpush1.msra.mxu0 0.0
    %1946 = vmatprep.mubr.f32.mxu0 0.0
    %v1947 = vand.u32 %v1732, 4294901760
    %1948 = vmatmul.mubr.f32.gmra.mrb[0].mxu0 %v1947
    %v1949 = vpop.f32.mrb[0].mxu0
    %v1950 = vadd.f32 %v1818, %v1949
    %v1951 = vpop.f32.mrb[0].mxu0
    %v1952 = vadd.f32 %v1820, %v1951
    %1953 = vdwg.mxu0
    %v1954 = vand.u32 %v1715, 4294901760
    %v1955 = vsub.f32 %v1715, %v1954
    %1956 = vmatprep.subr.mxu0 %v1955
    %v1957 = vand.u32 %v1714, 4294901760
    %v1958 = vsub.f32 %v1714, %v1957
    %1959 = vmatpush1.msra.mxu0 %v1958
    %v1960 = vand.u32 %v1717, 4294901760
    %v1961 = vsub.f32 %v1717, %v1960
    %1962 = vmatprep.subr.mxu0 %v1961
    %v1963 = vand.u32 %v1716, 4294901760
    %v1964 = vsub.f32 %v1716, %v1963
    %1965 = vmatpush1.msra.mxu0 %v1964
    %v1966 = vand.u32 %v1719, 4294901760
    %v1967 = vsub.f32 %v1719, %v1966
    %1968 = vmatprep.subr.mxu0 %v1967
    %v1969 = vand.u32 %v1718, 4294901760
    %v1970 = vsub.f32 %v1718, %v1969
    %1971 = vmatpush1.msra.mxu0 %v1970
    %v1972 = vand.u32 %v1721, 4294901760
    %v1973 = vsub.f32 %v1721, %v1972
    %1974 = vmatprep.subr.mxu0 %v1973
    %v1975 = vand.u32 %v1720, 4294901760
    %v1976 = vsub.f32 %v1720, %v1975
    %1977 = vmatpush1.msra.mxu0 %v1976
    %v1978 = vand.u32 %v1723, 4294901760
    %v1979 = vsub.f32 %v1723, %v1978
    %1980 = vmatprep.subr.mxu0 %v1979
    %v1981 = vand.u32 %v1722, 4294901760
    %v1982 = vsub.f32 %v1722, %v1981
    %1983 = vmatpush1.msra.mxu0 %v1982
    %v1984 = vand.u32 %v1725, 4294901760
    %v1985 = vsub.f32 %v1725, %v1984
    %1986 = vmatprep.subr.mxu0 %v1985
    %v1987 = vand.u32 %v1724, 4294901760
    %v1988 = vsub.f32 %v1724, %v1987
    %1989 = vmatpush1.msra.mxu0 %v1988
    %1990 = vmatprep.subr.mxu0 0.0
    %1991 = vmatpush1.msra.mxu0 0.0
    %1992 = vmatprep.subr.mxu0 0.0
    %1993 = vmatpush1.msra.mxu0 0.0
    %1994 = vmatprep.subr.mxu0 0.0
    %1995 = vmatpush1.msra.mxu0 0.0
    %1996 = vmatprep.subr.mxu0 0.0
    %1997 = vmatpush1.msra.mxu0 0.0
    %1998 = vmatprep.subr.mxu0 0.0
    %1999 = vmatpush1.msra.mxu0 0.0
    %2000 = vmatprep.subr.mxu0 0.0
    %2001 = vmatpush1.msra.mxu0 0.0
    %2002 = vmatprep.subr.mxu0 0.0
    %2003 = vmatpush1.msra.mxu0 0.0
    %2004 = vmatprep.subr.mxu0 0.0
    %2005 = vmatpush1.msra.mxu0 0.0
    %2006 = vmatprep.subr.mxu0 0.0
    %2007 = vmatpush1.msra.mxu0 0.0
    %2008 = vmatprep.subr.mxu0 0.0
    %2009 = vmatpush1.msra.mxu0 0.0
    %2010 = vmatprep.subr.mxu0 0.0
    %2011 = vmatpush1.msra.mxu0 0.0
    %2012 = vmatprep.subr.mxu0 0.0
    %2013 = vmatpush1.msra.mxu0 0.0
    %2014 = vmatprep.subr.mxu0 0.0
    %2015 = vmatpush1.msra.mxu0 0.0
    %2016 = vmatprep.subr.mxu0 0.0
    %2017 = vmatpush1.msra.mxu0 0.0
    %2018 = vmatprep.subr.mxu0 0.0
    %2019 = vmatpush1.msra.mxu0 0.0
    %2020 = vmatprep.subr.mxu0 0.0
    %2021 = vmatpush1.msra.mxu0 0.0
    %2022 = vmatprep.subr.mxu0 0.0
    %2023 = vmatpush1.msra.mxu0 0.0
    %2024 = vmatprep.subr.mxu0 0.0
    %2025 = vmatpush1.msra.mxu0 0.0
    %2026 = vmatprep.subr.mxu0 0.0
    %2027 = vmatpush1.msra.mxu0 0.0
    %2028 = vmatprep.subr.mxu0 0.0
    %2029 = vmatpush1.msra.mxu0 0.0
    %2030 = vmatprep.subr.mxu0 0.0
    %2031 = vmatpush1.msra.mxu0 0.0
    %2032 = vmatprep.subr.mxu0 0.0
    %2033 = vmatpush1.msra.mxu0 0.0
    %2034 = vmatprep.subr.mxu0 0.0
    %2035 = vmatpush1.msra.mxu0 0.0
    %2036 = vmatprep.subr.mxu0 0.0
    %2037 = vmatpush1.msra.mxu0 0.0
    %2038 = vmatprep.subr.mxu0 0.0
    %2039 = vmatpush1.msra.mxu0 0.0
    %2040 = vmatprep.subr.mxu0 0.0
    %2041 = vmatpush1.msra.mxu0 0.0
    %2042 = vmatprep.mubr.f32.mxu0 0.0
    %v2043 = vand.u32 %v1732, 4294901760
    %v2044 = vsub.f32 %v1732, %v2043
    %2045 = vmatmul.mubr.f32.gmra.mrb[0].mxu0 %v2044
    %v2046 = vpop.f32.mrb[0].mxu0
    %v2047 = vadd.f32 %v1950, %v2046
    %v2048 = vpop.f32.mrb[0].mxu0
    %v2049 = vadd.f32 %v1952, %v2048
    %2050 = vdwg.mxu0
    %v2051 = vand.u32 %v1715, 4294901760
    %2052 = vmatprep.subr.mxu0 %v2051
    %v2053 = vand.u32 %v1714, 4294901760
    %2054 = vmatpush1.msra.mxu0 %v2053
    %v2055 = vand.u32 %v1717, 4294901760
    %2056 = vmatprep.subr.mxu0 %v2055
    %v2057 = vand.u32 %v1716, 4294901760
    %2058 = vmatpush1.msra.mxu0 %v2057
    %v2059 = vand.u32 %v1719, 4294901760
    %2060 = vmatprep.subr.mxu0 %v2059
    %v2061 = vand.u32 %v1718, 4294901760
    %2062 = vmatpush1.msra.mxu0 %v2061
    %v2063 = vand.u32 %v1721, 4294901760
    %2064 = vmatprep.subr.mxu0 %v2063
    %v2065 = vand.u32 %v1720, 4294901760
    %2066 = vmatpush1.msra.mxu0 %v2065
    %v2067 = vand.u32 %v1723, 4294901760
    %2068 = vmatprep.subr.mxu0 %v2067
    %v2069 = vand.u32 %v1722, 4294901760
    %2070 = vmatpush1.msra.mxu0 %v2069
    %v2071 = vand.u32 %v1725, 4294901760
    %2072 = vmatprep.subr.mxu0 %v2071
    %v2073 = vand.u32 %v1724, 4294901760
    %2074 = vmatpush1.msra.mxu0 %v2073
    %2075 = vmatprep.subr.mxu0 0.0
    %2076 = vmatpush1.msra.mxu0 0.0
    %2077 = vmatprep.subr.mxu0 0.0
    %2078 = vmatpush1.msra.mxu0 0.0
    %2079 = vmatprep.subr.mxu0 0.0
    %2080 = vmatpush1.msra.mxu0 0.0
    %2081 = vmatprep.subr.mxu0 0.0
    %2082 = vmatpush1.msra.mxu0 0.0
    %2083 = vmatprep.subr.mxu0 0.0
    %2084 = vmatpush1.msra.mxu0 0.0
    %2085 = vmatprep.subr.mxu0 0.0
    %2086 = vmatpush1.msra.mxu0 0.0
    %2087 = vmatprep.subr.mxu0 0.0
    %2088 = vmatpush1.msra.mxu0 0.0
    %2089 = vmatprep.subr.mxu0 0.0
    %2090 = vmatpush1.msra.mxu0 0.0
    %2091 = vmatprep.subr.mxu0 0.0
    %2092 = vmatpush1.msra.mxu0 0.0
    %2093 = vmatprep.subr.mxu0 0.0
    %2094 = vmatpush1.msra.mxu0 0.0
    %2095 = vmatprep.subr.mxu0 0.0
    %2096 = vmatpush1.msra.mxu0 0.0
    %2097 = vmatprep.subr.mxu0 0.0
    %2098 = vmatpush1.msra.mxu0 0.0
    %2099 = vmatprep.subr.mxu0 0.0
    %2100 = vmatpush1.msra.mxu0 0.0
    %2101 = vmatprep.subr.mxu0 0.0
    %2102 = vmatpush1.msra.mxu0 0.0
    %2103 = vmatprep.subr.mxu0 0.0
    %2104 = vmatpush1.msra.mxu0 0.0
    %2105 = vmatprep.subr.mxu0 0.0
    %2106 = vmatpush1.msra.mxu0 0.0
    %2107 = vmatprep.subr.mxu0 0.0
    %2108 = vmatpush1.msra.mxu0 0.0
    %2109 = vmatprep.subr.mxu0 0.0
    %2110 = vmatpush1.msra.mxu0 0.0
    %2111 = vmatprep.subr.mxu0 0.0
    %2112 = vmatpush1.msra.mxu0 0.0
    %2113 = vmatprep.subr.mxu0 0.0
    %2114 = vmatpush1.msra.mxu0 0.0
    %2115 = vmatprep.subr.mxu0 0.0
    %2116 = vmatpush1.msra.mxu0 0.0
    %2117 = vmatprep.subr.mxu0 0.0
    %2118 = vmatpush1.msra.mxu0 0.0
    %2119 = vmatprep.subr.mxu0 0.0
    %2120 = vmatpush1.msra.mxu0 0.0
    %2121 = vmatprep.subr.mxu0 0.0
    %2122 = vmatpush1.msra.mxu0 0.0
    %2123 = vmatprep.subr.mxu0 0.0
    %2124 = vmatpush1.msra.mxu0 0.0
    %2125 = vmatprep.subr.mxu0 0.0
    %2126 = vmatpush1.msra.mxu0 0.0
    %2127 = vmatprep.mubr.f32.mxu0 0.0
    %v2128 = vand.u32 %v1732, 4294901760
    %v2129 = vsub.f32 %v1732, %v2128
    %v2130 = vand.u32 %v2129, 4294901760
    %2131 = vmatmul.mubr.f32.gmra.mrb[0].mxu0 %v2130
    %v2132 = vpop.f32.mrb[0].mxu0
    %v2133 = vadd.f32 %v2047, %v2132
    %v2134 = vpop.f32.mrb[0].mxu0
    %v2135 = vadd.f32 %v2049, %v2134
    %2136 = vdwg.mxu0
    %v2137 = vand.u32 %v1715, 4294901760
    %v2138 = vsub.f32 %v1715, %v2137
    %v2139 = vand.u32 %v2138, 4294901760
    %2140 = vmatprep.subr.mxu0 %v2139
    %v2141 = vand.u32 %v1714, 4294901760
    %v2142 = vsub.f32 %v1714, %v2141
    %v2143 = vand.u32 %v2142, 4294901760
    %2144 = vmatpush1.msra.mxu0 %v2143
    %v2145 = vand.u32 %v1717, 4294901760
    %v2146 = vsub.f32 %v1717, %v2145
    %v2147 = vand.u32 %v2146, 4294901760
    %2148 = vmatprep.subr.mxu0 %v2147
    %v2149 = vand.u32 %v1716, 4294901760
    %v2150 = vsub.f32 %v1716, %v2149
    %v2151 = vand.u32 %v2150, 4294901760
    %2152 = vmatpush1.msra.mxu0 %v2151
    %v2153 = vand.u32 %v1719, 4294901760
    %v2154 = vsub.f32 %v1719, %v2153
    %v2155 = vand.u32 %v2154, 4294901760
    %2156 = vmatprep.subr.mxu0 %v2155
    %v2157 = vand.u32 %v1718, 4294901760
    %v2158 = vsub.f32 %v1718, %v2157
    %v2159 = vand.u32 %v2158, 4294901760
    %2160 = vmatpush1.msra.mxu0 %v2159
    %v2161 = vand.u32 %v1721, 4294901760
    %v2162 = vsub.f32 %v1721, %v2161
    %v2163 = vand.u32 %v2162, 4294901760
    %2164 = vmatprep.subr.mxu0 %v2163
    %v2165 = vand.u32 %v1720, 4294901760
    %v2166 = vsub.f32 %v1720, %v2165
    %v2167 = vand.u32 %v2166, 4294901760
    %2168 = vmatpush1.msra.mxu0 %v2167
    %v2169 = vand.u32 %v1723, 4294901760
    %v2170 = vsub.f32 %v1723, %v2169
    %v2171 = vand.u32 %v2170, 4294901760
    %2172 = vmatprep.subr.mxu0 %v2171
    %v2173 = vand.u32 %v1722, 4294901760
    %v2174 = vsub.f32 %v1722, %v2173
    %v2175 = vand.u32 %v2174, 4294901760
    %2176 = vmatpush1.msra.mxu0 %v2175
    %v2177 = vand.u32 %v1725, 4294901760
    %v2178 = vsub.f32 %v1725, %v2177
    %v2179 = vand.u32 %v2178, 4294901760
    %2180 = vmatprep.subr.mxu0 %v2179
    %v2181 = vand.u32 %v1724, 4294901760
    %v2182 = vsub.f32 %v1724, %v2181
    %v2183 = vand.u32 %v2182, 4294901760
    %2184 = vmatpush1.msra.mxu0 %v2183
    %2185 = vmatprep.subr.mxu0 0.0
    %2186 = vmatpush1.msra.mxu0 0.0
    %2187 = vmatprep.subr.mxu0 0.0
    %2188 = vmatpush1.msra.mxu0 0.0
    %2189 = vmatprep.subr.mxu0 0.0
    %2190 = vmatpush1.msra.mxu0 0.0
    %2191 = vmatprep.subr.mxu0 0.0
    %2192 = vmatpush1.msra.mxu0 0.0
    %2193 = vmatprep.subr.mxu0 0.0
    %2194 = vmatpush1.msra.mxu0 0.0
    %2195 = vmatprep.subr.mxu0 0.0
    %2196 = vmatpush1.msra.mxu0 0.0
    %2197 = vmatprep.subr.mxu0 0.0
    %2198 = vmatpush1.msra.mxu0 0.0
    %2199 = vmatprep.subr.mxu0 0.0
    %2200 = vmatpush1.msra.mxu0 0.0
    %2201 = vmatprep.subr.mxu0 0.0
    %2202 = vmatpush1.msra.mxu0 0.0
    %2203 = vmatprep.subr.mxu0 0.0
    %2204 = vmatpush1.msra.mxu0 0.0
    %2205 = vmatprep.subr.mxu0 0.0
    %2206 = vmatpush1.msra.mxu0 0.0
    %2207 = vmatprep.subr.mxu0 0.0
    %2208 = vmatpush1.msra.mxu0 0.0
    %2209 = vmatprep.subr.mxu0 0.0
    %2210 = vmatpush1.msra.mxu0 0.0
    %2211 = vmatprep.subr.mxu0 0.0
    %2212 = vmatpush1.msra.mxu0 0.0
    %2213 = vmatprep.subr.mxu0 0.0
    %2214 = vmatpush1.msra.mxu0 0.0
    %2215 = vmatprep.subr.mxu0 0.0
    %2216 = vmatpush1.msra.mxu0 0.0
    %2217 = vmatprep.subr.mxu0 0.0
    %2218 = vmatpush1.msra.mxu0 0.0
    %2219 = vmatprep.subr.mxu0 0.0
    %2220 = vmatpush1.msra.mxu0 0.0
    %2221 = vmatprep.subr.mxu0 0.0
    %2222 = vmatpush1.msra.mxu0 0.0
    %2223 = vmatprep.subr.mxu0 0.0
    %2224 = vmatpush1.msra.mxu0 0.0
    %2225 = vmatprep.subr.mxu0 0.0
    %2226 = vmatpush1.msra.mxu0 0.0
    %2227 = vmatprep.subr.mxu0 0.0
    %2228 = vmatpush1.msra.mxu0 0.0
    %2229 = vmatprep.subr.mxu0 0.0
    %2230 = vmatpush1.msra.mxu0 0.0
    %2231 = vmatprep.subr.mxu0 0.0
    %2232 = vmatpush1.msra.mxu0 0.0
    %2233 = vmatprep.subr.mxu0 0.0
    %2234 = vmatpush1.msra.mxu0 0.0
    %2235 = vmatprep.subr.mxu0 0.0
    %2236 = vmatpush1.msra.mxu0 0.0
    %2237 = vmatprep.mubr.f32.mxu0 0.0
    %v2238 = vand.u32 %v1732, 4294901760
    %2239 = vmatmul.mubr.f32.gmra.mrb[0].mxu0 %v2238
    %v2240 = vpop.f32.mrb[0].mxu0
    %v2241 = vadd.f32 %v2133, %v2240
    %v2242 = vpop.f32.mrb[0].mxu0
    %v2243 = vadd.f32 %v2135, %v2242
    %2244 = vdwg.mxu0
    %v2245 = vand.u32 %v1715, 4294901760
    %2246 = vmatprep.subr.mxu0 %v2245
    %v2247 = vand.u32 %v1714, 4294901760
    %2248 = vmatpush1.msra.mxu0 %v2247
    %v2249 = vand.u32 %v1717, 4294901760
    %2250 = vmatprep.subr.mxu0 %v2249
    %v2251 = vand.u32 %v1716, 4294901760
    %2252 = vmatpush1.msra.mxu0 %v2251
    %v2253 = vand.u32 %v1719, 4294901760
    %2254 = vmatprep.subr.mxu0 %v2253
    %v2255 = vand.u32 %v1718, 4294901760
    %2256 = vmatpush1.msra.mxu0 %v2255
    %v2257 = vand.u32 %v1721, 4294901760
    %2258 = vmatprep.subr.mxu0 %v2257
    %v2259 = vand.u32 %v1720, 4294901760
    %2260 = vmatpush1.msra.mxu0 %v2259
    %v2261 = vand.u32 %v1723, 4294901760
    %2262 = vmatprep.subr.mxu0 %v2261
    %v2263 = vand.u32 %v1722, 4294901760
    %2264 = vmatpush1.msra.mxu0 %v2263
    %v2265 = vand.u32 %v1725, 4294901760
    %2266 = vmatprep.subr.mxu0 %v2265
    %v2267 = vand.u32 %v1724, 4294901760
    %2268 = vmatpush1.msra.mxu0 %v2267
    %2269 = vmatprep.subr.mxu0 0.0
    %2270 = vmatpush1.msra.mxu0 0.0
    %2271 = vmatprep.subr.mxu0 0.0
    %2272 = vmatpush1.msra.mxu0 0.0
    %2273 = vmatprep.subr.mxu0 0.0
    %2274 = vmatpush1.msra.mxu0 0.0
    %2275 = vmatprep.subr.mxu0 0.0
    %2276 = vmatpush1.msra.mxu0 0.0
    %2277 = vmatprep.subr.mxu0 0.0
    %2278 = vmatpush1.msra.mxu0 0.0
    %2279 = vmatprep.subr.mxu0 0.0
    %2280 = vmatpush1.msra.mxu0 0.0
    %2281 = vmatprep.subr.mxu0 0.0
    %2282 = vmatpush1.msra.mxu0 0.0
    %2283 = vmatprep.subr.mxu0 0.0
    %2284 = vmatpush1.msra.mxu0 0.0
    %2285 = vmatprep.subr.mxu0 0.0
    %2286 = vmatpush1.msra.mxu0 0.0
    %2287 = vmatprep.subr.mxu0 0.0
    %2288 = vmatpush1.msra.mxu0 0.0
    %2289 = vmatprep.subr.mxu0 0.0
    %2290 = vmatpush1.msra.mxu0 0.0
    %2291 = vmatprep.subr.mxu0 0.0
    %2292 = vmatpush1.msra.mxu0 0.0
    %2293 = vmatprep.subr.mxu0 0.0
    %2294 = vmatpush1.msra.mxu0 0.0
    %2295 = vmatprep.subr.mxu0 0.0
    %2296 = vmatpush1.msra.mxu0 0.0
    %2297 = vmatprep.subr.mxu0 0.0
    %2298 = vmatpush1.msra.mxu0 0.0
    %2299 = vmatprep.subr.mxu0 0.0
    %2300 = vmatpush1.msra.mxu0 0.0
    %2301 = vmatprep.subr.mxu0 0.0
    %2302 = vmatpush1.msra.mxu0 0.0
    %2303 = vmatprep.subr.mxu0 0.0
    %2304 = vmatpush1.msra.mxu0 0.0
    %2305 = vmatprep.subr.mxu0 0.0
    %2306 = vmatpush1.msra.mxu0 0.0
    %2307 = vmatprep.subr.mxu0 0.0
    %2308 = vmatpush1.msra.mxu0 0.0
    %2309 = vmatprep.subr.mxu0 0.0
    %2310 = vmatpush1.msra.mxu0 0.0
    %2311 = vmatprep.subr.mxu0 0.0
    %2312 = vmatpush1.msra.mxu0 0.0
    %2313 = vmatprep.subr.mxu0 0.0
    %2314 = vmatpush1.msra.mxu0 0.0
    %2315 = vmatprep.subr.mxu0 0.0
    %2316 = vmatpush1.msra.mxu0 0.0
    %2317 = vmatprep.subr.mxu0 0.0
    %2318 = vmatpush1.msra.mxu0 0.0
    %2319 = vmatprep.subr.mxu0 0.0
    %2320 = vmatpush1.msra.mxu0 0.0
    %2321 = vmatprep.mubr.f32.mxu0 0.0
    %v2322 = vand.u32 %v1732, 4294901760
    %2323 = vmatmul.mubr.f32.gmra.mrb[0].mxu0 %v2322
    %v2324 = vpop.f32.mrb[0].mxu0
    %v2325 = vadd.f32 %v2241, %v2324
    %v2326 = vpop.f32.mrb[0].mxu0
    %v2327 = vadd.f32 %v2243, %v2326
    %2328 = vdwg.mxu0
    %v2329 = vadd.f32 %v2325, %v15
    %v2330 = vadd.f32 %v2327, %v16
    %2331 = vst [vmem:[#allocation2] sm:$0xff] %v2329
    %2332 = vst [vmem:[#allocation2 + $0x8] sm:$0xff] %v2330
    // Predicated region
    $region14: #{tpu_custom_call.1} parent=1 // pred_check
      _
    $region15: #{tpu_custom_call.1} parent=1 // pred_check_branch
      %2334 = sbr.rel (0) target = $region17
    $region16: #{tpu_custom_call.1} parent=1 // pred_region
      %s2336 = ssub.s32 256, 256
      %2337 = vsyncadd [#allocation3], %s2336
      %s2339 = sshll.u32 [#allocation2], 4
      %s2340 = int_to_ptr.vmem [resolvable:$true] %s2339
      %2342 = dma.vmem_to_hbm [thread:$0]  %s2340, 256, %s3, [#allocation3]
    $region17: #{tpu_custom_call.1} parent=1 // pred_fallthru
      _
    // Predicated region
    $region18: #{tpu_custom_call.1} parent=1 // pred_check
      _
    $region19: #{tpu_custom_call.1} parent=1 // pred_check_branch
      %2344 = sbr.rel (0) target = $region21
    $region20: #{tpu_custom_call.1} parent=1 // pred_region
      %2345 = dma.done [#allocation3], 256
    $region21: #{tpu_custom_call.1} parent=1 // pred_fallthru
      _
    %2346 = vsyncpa [#allocation3], 1

</llo_original>
